<compile_context>
chip_gen: v5e
topology: v5e:2x2
jax: 0.10.0
libtpu: 0.0.40
codegen_flags: <defaults>
</compile_context>

<pallas_src>
import functools

import jax
import jax.numpy as jnp
from jax import lax
from jax.experimental import pallas as pl
from jax.experimental.pallas import tpu as pltpu

DROPOUT_P = 0.0  # MyModel uses dropout_p = 0.0 -> dropout is the identity.


def _flash_kernel(q_ref, k_ref, v_ref, o_ref,
                  qs_ref, m_ref, l_ref, acc_ref,
                  *, scale, precision):
    """One (batch-head block, q tile) x kv tile step of flash attention.

    q_ref:   (Bb, tq, D) in   (resident across the whole kv axis)
    k_ref:   (Bb, tk, D) in
    v_ref:   (Bb, tk, D) in
    o_ref:   (Bb, tq, D) out  (written on the last kv step)
    qs_ref:  (Bb, tq, D) VMEM scratch: Q with the softmax scale folded in
    m_ref:   (Bb, tq, 1) f32 running max
    l_ref:   (Bb, tq, 1) f32 running denominator
    acc_ref: (Bb, tq, D) f32 output accumulator
    """
    kv = pl.program_id(2)

    @pl.when(kv == 0)
    def _init():
        # Q is resident across the whole kv sweep (index map ignores the kv
        # index), so fold the scale into it exactly once per (b, q-tile)
        # instead of re-running Bb*tq*D VALU multiplies every kv step.
        qs_ref[...] = (q_ref[...] * scale).astype(qs_ref.dtype)
        m_ref[...] = jnp.full(m_ref.shape, -jnp.inf, dtype=m_ref.dtype)
        l_ref[...] = jnp.zeros(l_ref.shape, dtype=l_ref.dtype)
        acc_ref[...] = jnp.zeros(acc_ref.shape, dtype=acc_ref.dtype)

    q = qs_ref[...]                                  # (Bb, tq, D)
    k = k_ref[...]                                   # (Bb, tk, D)
    v = v_ref[...]                                   # (Bb, tk, D)

    # s = Q @ K^T without materializing a transposed K: contract over D,
    # batch over the (batch*head) block dim. f32 accumulation on the MXU.
    s = lax.dot_general(
        q, k,
        dimension_numbers=(((2,), (2,)), ((0,), (0,))),
        precision=precision,
        preferred_element_type=jnp.float32)          # (Bb, tq, tk)

    # Online (streaming) softmax update; all state stays f32.
    # NOTE: for D <= ~64 the exp over (Bb, tq, tk) is the EUP-bound critical
    # path, so there is no benefit in enlarging MXU tiles further here.
    m_prev = m_ref[...]
    m_new = jnp.maximum(m_prev, jnp.max(s, axis=-1, keepdims=True))
    alpha = jnp.exp(m_prev - m_new)                  # rescale for old state
    p = jnp.exp(s - m_new)                           # (Bb, tq, tk), f32
    l_ref[...] = alpha * l_ref[...] + jnp.sum(p, axis=-1, keepdims=True)

    pv = lax.dot_general(
        p.astype(v.dtype), v,
        dimension_numbers=(((2,), (1,)), ((0,), (0,))),
        precision=precision,
        preferred_element_type=jnp.float32)          # (Bb, tq, D)
    acc_ref[...] = alpha * acc_ref[...] + pv
    m_ref[...] = m_new

    @pl.when(kv == pl.num_programs(2) - 1)
    def _finalize():
        # dropout_p == 0.0 -> identity, so just normalize and store.
        # Exact divide: it runs once per q tile (not per kv step), so an
        # approximate reciprocal buys nothing and only costs accuracy.
        o_ref[...] = (acc_ref[...] / l_ref[...]).astype(o_ref.dtype)


def _vmem_capacity_bytes():
    try:
        return int(pltpu.get_tpu_info().vmem_capacity_bytes)
    except Exception:
        return 64 * 2**20  # conservative (v7x-sized) fallback


def _pick_seq_tile(seq, target):
    """Largest tile <= target that divides seq and is a multiple of 8
    (or the full sequence when seq is small / has no such divisor)."""
    if seq <= target:
        return seq
    t = (target // 8) * 8
    while t >= 8:
        if seq % t == 0:
            return t
        t -= 8
    return seq


def _pick_batch_block(bh, tq, tk, d, itemsize, budget_bytes):
    """How many (batch, head) pairs to process per program.

    Batching (b, h) pairs amortizes the ~0.35 us per-grid-step overhead for
    tiny per-head shapes.  Once the per-step matmul work is already large
    (tq*tk >= 128*128) batching only adds vreg pressure / spills, so Bb = 1.
    """
    if tq * tk >= 128 * 128:
        return 1
    per = (2 * tq * tk * 4                       # s and p logits (f32, both live)
           + tq * d * 4                          # f32 accumulator scratch
           + tq * d * itemsize                   # scaled-Q scratch
           + 2 * 2 * (tq + tk) * d * itemsize)   # double-buffered q/o + k/v tiles
    best = 1
    for bb in range(1, bh + 1):
        if bh % bb == 0 and bb * per <= budget_bytes:
            best = bb
    return best


def sdpa_pallas(query, key, value, *, dropout_p=DROPOUT_P, precision="auto"):
    """query/key/value: (B, H, S, D) -> (B, H, S, D); matches MyModel.forward."""
    del dropout_p  # p = 0.0 -> identity
    B, H, S, D = query.shape
    assert key.shape == (B, H, S, D) and value.shape == (B, H, S, D)

    key_dimension = D
    scale = 1.0 / key_dimension ** (-0.5)        # == sqrt(D), as in MyModel

    if precision == "auto":
        # f32 inputs: keep the accurate MXU path so the sqrt(D)-amplified
        # logits are not perturbed at bf16 level.  bf16 inputs: native rate.
        precision = (lax.Precision.HIGHEST
                     if query.dtype == jnp.float32 else None)

    BH = B * H
    q3 = query.reshape(BH, S, D)
    k3 = key.reshape(BH, S, D)
    v3 = value.reshape(BH, S, D)

    itemsize = jnp.dtype(query.dtype).itemsize
    vmem_cap = _vmem_capacity_bytes()
    large_vmem = vmem_cap >= 100 * 2**20         # 128-MiB v5e/v6e vs 64-MiB v7x
    budget = (24 * 2**20) if large_vmem else (8 * 2**20)

    tq = _pick_seq_tile(S, 256)
    tk = _pick_seq_tile(S, 512 if large_vmem else 256)
    Bb = _pick_batch_block(BH, tq, tk, D, itemsize, budget)

    # Never over-batch into a single program when there are >= 2 programs of
    # work: v7x shards the "parallel" axes across its two TensorCores.
    while Bb > 1 and (BH // Bb) * (S // tq) < 2:
        Bb -= 1
        while BH % Bb:
            Bb -= 1

    grid = (BH // Bb, S // tq, S // tk)

    q_spec = pl.BlockSpec((Bb, tq, D), lambda b, qi, ki: (b, qi, 0))
    kv_spec = pl.BlockSpec((Bb, tk, D), lambda b, qi, ki: (b, ki, 0))
    o_spec = pl.BlockSpec((Bb, tq, D), lambda b, qi, ki: (b, qi, 0))

    # VMEM budget: double-buffered I/O tiles + scratch + live logits, with
    # headroom, capped safely below the part's physical VMEM.
    tiles_bytes = 2 * Bb * (2 * tq * D + 2 * tk * D) * itemsize
    scratch_bytes = Bb * tq * ((D + 2) * 4 + D * itemsize)
    logits_bytes = 2 * Bb * tq * tk * 4
    need = tiles_bytes + scratch_bytes + logits_bytes
    vmem_limit = int(min(max(2 * need, 16 * 2**20), (vmem_cap * 3) // 4))

    def _run(prec):
        kernel = functools.partial(_flash_kernel, scale=scale, precision=prec)
        return pl.pallas_call(
            kernel,
            out_shape=jax.ShapeDtypeStruct((BH, S, D), query.dtype),
            grid_spec=pltpu.PrefetchScalarGridSpec(
                num_scalar_prefetch=0,
                grid=grid,
                in_specs=[q_spec, kv_spec, kv_spec],
                out_specs=o_spec,
                scratch_shapes=[
                    pltpu.VMEM((Bb, tq, D), query.dtype),   # scaled Q
                    pltpu.VMEM((Bb, tq, 1), jnp.float32),   # running max  m
                    pltpu.VMEM((Bb, tq, 1), jnp.float32),   # running sum  l
                    pltpu.VMEM((Bb, tq, D), jnp.float32),   # output accumulator
                ],
            ),
            compiler_params=pltpu.CompilerParams(
                dimension_semantics=("parallel", "parallel", "arbitrary"),
                vmem_limit_bytes=vmem_limit,
            ),
        )(q3, k3, v3)

    try:
        out3 = _run(precision)
    except Exception:
        if precision is None:
            raise
        # Fallback for Mosaic builds that reject an explicit matmul precision:
        # the default f32 MXU path is still the accurate multi-pass one.
        out3 = _run(None)

    return out3.reshape(B, H, S, D)


def sdpa_reference(query, key, value):
    D = query.shape[-1]
    scale = 1.0 / D ** (-0.5)                    # == sqrt(D), as in MyModel
    qk = jnp.einsum("bhqd,bhkd->bhqk", query, key,
                    precision=lax.Precision.HIGHEST) * scale
    p = jax.nn.softmax(qk, axis=-1)
    return jnp.einsum("bhqk,bhkd->bhqd", p, value,
                      precision=lax.Precision.HIGHEST)


if __name__ == "__main__":
    B, H, S, D = 2, 4, 8, 32
    rng = jax.random.PRNGKey(0)
    kq, kk, kv = jax.random.split(rng, 3)
    query = jax.random.normal(kq, (B, H, S, D), dtype=jnp.float32)
    key = jax.random.normal(kk, (B, H, S, D), dtype=jnp.float32)
    value = jax.random.normal(kv, (B, H, S, D), dtype=jnp.float32)

    out = jax.block_until_ready(sdpa_pallas(query, key, value))

    ref = sdpa_reference(query, key, value)
    assert out.shape == (B, H, S, D)
    assert jnp.allclose(out, ref, atol=5e-3, rtol=5e-3), "mismatch vs reference"

    print("KERNEL_OK")
</pallas_src>

<mosaic_0001>
module attributes {stable_mosaic.version = 11 : i64} {
  func.func @_flash_kernel(%arg0: i32, %arg1: i32, %arg2: i32, %arg3: memref<4x8x32xf32, #tpu.memory_space<vmem>>, %arg4: memref<4x8x32xf32, #tpu.memory_space<vmem>>, %arg5: memref<4x8x32xf32, #tpu.memory_space<vmem>>, %arg6: memref<4x8x32xf32, #tpu.memory_space<vmem>>, %arg7: memref<4x8x32xf32, #tpu.memory_space<vmem>>, %arg8: memref<4x8x1xf32, #tpu.memory_space<vmem>>, %arg9: memref<4x8x1xf32, #tpu.memory_space<vmem>>, %arg10: memref<4x8x32xf32, #tpu.memory_space<vmem>>) attributes {dimension_semantics = [#tpu.dimension_semantics<parallel>, #tpu.dimension_semantics<parallel>, #tpu.dimension_semantics<arbitrary>], iteration_bounds = array<i64: 2, 1, 1>, scalar_prefetch = 0 : i64, scratch_operands = 4 : i64, tpu.core_type = #tpu.core_type<tc>, window_params = [{transform_indices = @transform_0, window_bounds = array<i64: 4, 8, 32>}, {transform_indices = @transform_1, window_bounds = array<i64: 4, 8, 32>}, {transform_indices = @transform_2, window_bounds = array<i64: 4, 8, 32>}, {transform_indices = @transform_3, window_bounds = array<i64: 4, 8, 32>}]} {
    %c0_i32 = arith.constant 0 : i32
    %0 = arith.cmpi eq, %arg2, %c0_i32 : i32
    %1 = arith.extui %0 : i1 to i32
    %c0_i32_0 = arith.constant 0 : i32
    %2 = arith.cmpi ne, %1, %c0_i32_0 : i32
    scf.if %2 {
      %c0_32 = arith.constant 0 : index
      %c0_33 = arith.constant 0 : index
      %c0_34 = arith.constant 0 : index
      %32 = vector.load %arg3[%c0_32, %c0_33, %c0_34] : memref<4x8x32xf32, #tpu.memory_space<vmem>>, vector<4x8x32xf32>
      %cst_35 = arith.constant 5.65685415 : f32
      %33 = vector.broadcast %cst_35 : f32 to vector<4x8x32xf32>
      %34 = arith.mulf %32, %33 : vector<4x8x32xf32>
      %c0_36 = arith.constant 0 : index
      %c0_37 = arith.constant 0 : index
      %c0_38 = arith.constant 0 : index
      %35 = vector.load %arg7[%c0_36, %c0_37, %c0_38] : memref<4x8x32xf32, #tpu.memory_space<vmem>>, vector<4x8x32xf32>
      tpu.vector_store %arg7[%c0_36, %c0_37, %c0_38], %34 {strides = array<i32>} : memref<4x8x32xf32, #tpu.memory_space<vmem>>, vector<4x8x32xf32>,
      %cst_39 = arith.constant 0xFF800000 : f32
      %36 = vector.broadcast %cst_39 : f32 to vector<4x8x1xf32>
      %c0_40 = arith.constant 0 : index
      %c0_41 = arith.constant 0 : index
      %c0_42 = arith.constant 0 : index
      %37 = vector.load %arg8[%c0_40, %c0_41, %c0_42] : memref<4x8x1xf32, #tpu.memory_space<vmem>>, vector<4x8x1xf32>
      tpu.vector_store %arg8[%c0_40, %c0_41, %c0_42], %36 {strides = array<i32>} : memref<4x8x1xf32, #tpu.memory_space<vmem>>, vector<4x8x1xf32>,
      %cst_43 = arith.constant 0.000000e+00 : f32
      %38 = vector.broadcast %cst_43 : f32 to vector<4x8x1xf32>
      %c0_44 = arith.constant 0 : index
      %c0_45 = arith.constant 0 : index
      %c0_46 = arith.constant 0 : index
      %39 = vector.load %arg9[%c0_44, %c0_45, %c0_46] : memref<4x8x1xf32, #tpu.memory_space<vmem>>, vector<4x8x1xf32>
      tpu.vector_store %arg9[%c0_44, %c0_45, %c0_46], %38 {strides = array<i32>} : memref<4x8x1xf32, #tpu.memory_space<vmem>>, vector<4x8x1xf32>,
      %cst_47 = arith.constant 0.000000e+00 : f32
      %40 = vector.broadcast %cst_47 : f32 to vector<4x8x32xf32>
      %c0_48 = arith.constant 0 : index
      %c0_49 = arith.constant 0 : index
      %c0_50 = arith.constant 0 : index
      %41 = vector.load %arg10[%c0_48, %c0_49, %c0_50] : memref<4x8x32xf32, #tpu.memory_space<vmem>>, vector<4x8x32xf32>
      tpu.vector_store %arg10[%c0_48, %c0_49, %c0_50], %40 {strides = array<i32>} : memref<4x8x32xf32, #tpu.memory_space<vmem>>, vector<4x8x32xf32>,
    } else {
    }
    %c0 = arith.constant 0 : index
    %c0_1 = arith.constant 0 : index
    %c0_2 = arith.constant 0 : index
    %3 = vector.load %arg7[%c0, %c0_1, %c0_2] : memref<4x8x32xf32, #tpu.memory_space<vmem>>, vector<4x8x32xf32>
    %c0_3 = arith.constant 0 : index
    %c0_4 = arith.constant 0 : index
    %c0_5 = arith.constant 0 : index
    %4 = vector.load %arg4[%c0_3, %c0_4, %c0_5] : memref<4x8x32xf32, #tpu.memory_space<vmem>>, vector<4x8x32xf32>
    %c0_6 = arith.constant 0 : index
    %c0_7 = arith.constant 0 : index
    %c0_8 = arith.constant 0 : index
    %5 = vector.load %arg5[%c0_6, %c0_7, %c0_8] : memref<4x8x32xf32, #tpu.memory_space<vmem>>, vector<4x8x32xf32>
    %cst = arith.constant dense<0.000000e+00> : vector<4x8x8xf32>
    %6 = tpu.matmul %3, %4, %cst {dimension_numbers = #tpu.dot_dimension_numbers<[2], [2], [1], [1], [0, 0, 0, 1, 1, 1], [0], [0]>, precision = #tpu.contract_precision<fp32>} : vector<4x8x32xf32>, vector<4x8x32xf32>, vector<4x8x8xf32> -> vector<4x8x8xf32>
    %c0_9 = arith.constant 0 : index
    %c0_10 = arith.constant 0 : index
    %c0_11 = arith.constant 0 : index
    %7 = vector.load %arg8[%c0_9, %c0_10, %c0_11] : memref<4x8x1xf32, #tpu.memory_space<vmem>>, vector<4x8x1xf32>
    %cst_12 = arith.constant dense<0xFF800000> : vector<4x8xf32>
    %8 = vector.multi_reduction <maximumf>, %6, %cst_12 [2] : vector<4x8x8xf32> to vector<4x8xf32>
    %9 = vector.shape_cast %8 : vector<4x8xf32> to vector<4x8x1xf32>
    %10 = arith.maximumf %7, %9 : vector<4x8x1xf32>
    %11 = arith.subf %7, %10 : vector<4x8x1xf32>
    %12 = math.exp %11 : vector<4x8x1xf32>
    %13 = vector.broadcast %10 : vector<4x8x1xf32> to vector<4x8x8xf32>
    %14 = arith.subf %6, %13 : vector<4x8x8xf32>
    %15 = math.exp %14 : vector<4x8x8xf32>
    %c0_13 = arith.constant 0 : index
    %c0_14 = arith.constant 0 : index
    %c0_15 = arith.constant 0 : index
    %16 = vector.load %arg9[%c0_13, %c0_14, %c0_15] : memref<4x8x1xf32, #tpu.memory_space<vmem>>, vector<4x8x1xf32>
    %17 = arith.mulf %12, %16 : vector<4x8x1xf32>
    %cst_16 = arith.constant dense<0.000000e+00> : vector<4x8xf32>
    %18 = vector.multi_reduction <add>, %15, %cst_16 [2] : vector<4x8x8xf32> to vector<4x8xf32>
    %19 = vector.shape_cast %18 : vector<4x8xf32> to vector<4x8x1xf32>
    %20 = arith.addf %17, %19 : vector<4x8x1xf32>
    %c0_17 = arith.constant 0 : index
    %c0_18 = arith.constant 0 : index
    %c0_19 = arith.constant 0 : index
    %21 = vector.load %arg9[%c0_17, %c0_18, %c0_19] : memref<4x8x1xf32, #tpu.memory_space<vmem>>, vector<4x8x1xf32>
    tpu.vector_store %arg9[%c0_17, %c0_18, %c0_19], %20 {strides = array<i32>} : memref<4x8x1xf32, #tpu.memory_space<vmem>>, vector<4x8x1xf32>,
    %cst_20 = arith.constant dense<0.000000e+00> : vector<4x8x32xf32>
    %22 = tpu.matmul %15, %5, %cst_20 {dimension_numbers = #tpu.dot_dimension_numbers<[2], [1], [1], [2], [0, 0, 0, 1, 1, 2], [0], [0]>, precision = #tpu.contract_precision<fp32>} : vector<4x8x8xf32>, vector<4x8x32xf32>, vector<4x8x32xf32> -> vector<4x8x32xf32>
    %c0_21 = arith.constant 0 : index
    %c0_22 = arith.constant 0 : index
    %c0_23 = arith.constant 0 : index
    %23 = vector.load %arg10[%c0_21, %c0_22, %c0_23] : memref<4x8x32xf32, #tpu.memory_space<vmem>>, vector<4x8x32xf32>
    %24 = vector.broadcast %12 : vector<4x8x1xf32> to vector<4x8x32xf32>
    %25 = arith.mulf %24, %23 : vector<4x8x32xf32>
    %26 = arith.addf %25, %22 : vector<4x8x32xf32>
    %c0_24 = arith.constant 0 : index
    %c0_25 = arith.constant 0 : index
    %c0_26 = arith.constant 0 : index
    %27 = vector.load %arg10[%c0_24, %c0_25, %c0_26] : memref<4x8x32xf32, #tpu.memory_space<vmem>>, vector<4x8x32xf32>
    tpu.vector_store %arg10[%c0_24, %c0_25, %c0_26], %26 {strides = array<i32>} : memref<4x8x32xf32, #tpu.memory_space<vmem>>, vector<4x8x32xf32>,
    %c0_27 = arith.constant 0 : index
    %c0_28 = arith.constant 0 : index
    %c0_29 = arith.constant 0 : index
    %28 = vector.load %arg8[%c0_27, %c0_28, %c0_29] : memref<4x8x1xf32, #tpu.memory_space<vmem>>, vector<4x8x1xf32>
    tpu.vector_store %arg8[%c0_27, %c0_28, %c0_29], %10 {strides = array<i32>} : memref<4x8x1xf32, #tpu.memory_space<vmem>>, vector<4x8x1xf32>,
    %c0_i32_30 = arith.constant 0 : i32
    %29 = arith.cmpi eq, %arg2, %c0_i32_30 : i32
    %30 = arith.extui %29 : i1 to i32
    %c0_i32_31 = arith.constant 0 : i32
    %31 = arith.cmpi ne, %30, %c0_i32_31 : i32
    scf.if %31 {
      %c0_32 = arith.constant 0 : index
      %c0_33 = arith.constant 0 : index
      %c0_34 = arith.constant 0 : index
      %32 = vector.load %arg10[%c0_32, %c0_33, %c0_34] : memref<4x8x32xf32, #tpu.memory_space<vmem>>, vector<4x8x32xf32>
      %c0_35 = arith.constant 0 : index
      %c0_36 = arith.constant 0 : index
      %c0_37 = arith.constant 0 : index
      %33 = vector.load %arg9[%c0_35, %c0_36, %c0_37] : memref<4x8x1xf32, #tpu.memory_space<vmem>>, vector<4x8x1xf32>
      %34 = vector.broadcast %33 : vector<4x8x1xf32> to vector<4x8x32xf32>
      %35 = arith.divf %32, %34 : vector<4x8x32xf32>
      %c0_38 = arith.constant 0 : index
      %c0_39 = arith.constant 0 : index
      %c0_40 = arith.constant 0 : index
      %36 = vector.load %arg6[%c0_38, %c0_39, %c0_40] : memref<4x8x32xf32, #tpu.memory_space<vmem>>, vector<4x8x32xf32>
      tpu.vector_store %arg6[%c0_38, %c0_39, %c0_40], %35 {strides = array<i32>} : memref<4x8x32xf32, #tpu.memory_space<vmem>>, vector<4x8x32xf32>,
    } else {
    }
    return
  }
  func.func @transform_0(%arg0: i32, %arg1: i32, %arg2: i32) -> (i32, i32, i32) {
    %c0_i32 = arith.constant 0 : i32
    %c0_i32_0 = arith.constant 0 : i32
    return %arg0, %arg1, %c0_i32 : i32, i32, i32
  }
  func.func @transform_1(%arg0: i32, %arg1: i32, %arg2: i32) -> (i32, i32, i32) {
    %c0_i32 = arith.constant 0 : i32
    %c0_i32_0 = arith.constant 0 : i32
    return %arg0, %arg2, %c0_i32 : i32, i32, i32
  }
  func.func @transform_2(%arg0: i32, %arg1: i32, %arg2: i32) -> (i32, i32, i32) {
    %c0_i32 = arith.constant 0 : i32
    %c0_i32_0 = arith.constant 0 : i32
    return %arg0, %arg2, %c0_i32 : i32, i32, i32
  }
  func.func @transform_3(%arg0: i32, %arg1: i32, %arg2: i32) -> (i32, i32, i32) {
    %c0_i32 = arith.constant 0 : i32
    %c0_i32_0 = arith.constant 0 : i32
    return %arg0, %arg1, %c0_i32 : i32, i32, i32
  }
}

module attributes {stable_mosaic.version = 11 : i64} {
  func.func @_flash_kernel(%arg0: i32, %arg1: i32, %arg2: i32, %arg3: memref<4x8x32xf32, #tpu.memory_space<vmem>>, %arg4: memref<4x8x32xf32, #tpu.memory_space<vmem>>, %arg5: memref<4x8x32xf32, #tpu.memory_space<vmem>>, %arg6: memref<4x8x32xf32, #tpu.memory_space<vmem>>, %arg7: memref<4x8x32xf32, #tpu.memory_space<vmem>>, %arg8: memref<4x8x1xf32, #tpu.memory_space<vmem>>, %arg9: memref<4x8x1xf32, #tpu.memory_space<vmem>>, %arg10: memref<4x8x32xf32, #tpu.memory_space<vmem>>) attributes {dimension_semantics = [#tpu.dimension_semantics<parallel>, #tpu.dimension_semantics<parallel>, #tpu.dimension_semantics<arbitrary>], iteration_bounds = array<i64: 2, 1, 1>, scalar_prefetch = 0 : i64, scratch_operands = 4 : i64, tpu.core_type = #tpu.core_type<tc>, window_params = [{transform_indices = @transform_0, window_bounds = array<i64: 4, 8, 32>}, {transform_indices = @transform_1, window_bounds = array<i64: 4, 8, 32>}, {transform_indices = @transform_2, window_bounds = array<i64: 4, 8, 32>}, {transform_indices = @transform_3, window_bounds = array<i64: 4, 8, 32>}]} {
    %c0_i32 = arith.constant 0 : i32
    %0 = arith.cmpi eq, %arg2, %c0_i32 : i32
    %1 = arith.extui %0 : i1 to i32
    %c0_i32_0 = arith.constant 0 : i32
    %2 = arith.cmpi ne, %1, %c0_i32_0 : i32
    scf.if %2 {
      %c0_32 = arith.constant 0 : index
      %c0_33 = arith.constant 0 : index
      %c0_34 = arith.constant 0 : index
      %32 = vector.load %arg3[%c0_32, %c0_33, %c0_34] : memref<4x8x32xf32, #tpu.memory_space<vmem>>, vector<4x8x32xf32>
      %cst_35 = arith.constant 5.65685415 : f32
      %33 = vector.broadcast %cst_35 : f32 to vector<4x8x32xf32>
      %34 = arith.mulf %32, %33 : vector<4x8x32xf32>
      %c0_36 = arith.constant 0 : index
      %c0_37 = arith.constant 0 : index
      %c0_38 = arith.constant 0 : index
      %35 = vector.load %arg7[%c0_36, %c0_37, %c0_38] : memref<4x8x32xf32, #tpu.memory_space<vmem>>, vector<4x8x32xf32>
      tpu.vector_store %arg7[%c0_36, %c0_37, %c0_38], %34 {strides = array<i32>} : memref<4x8x32xf32, #tpu.memory_space<vmem>>, vector<4x8x32xf32>,
      %cst_39 = arith.constant 0xFF800000 : f32
      %36 = vector.broadcast %cst_39 : f32 to vector<4x8x1xf32>
      %c0_40 = arith.constant 0 : index
      %c0_41 = arith.constant 0 : index
      %c0_42 = arith.constant 0 : index
      %37 = vector.load %arg8[%c0_40, %c0_41, %c0_42] : memref<4x8x1xf32, #tpu.memory_space<vmem>>, vector<4x8x1xf32>
      tpu.vector_store %arg8[%c0_40, %c0_41, %c0_42], %36 {strides = array<i32>} : memref<4x8x1xf32, #tpu.memory_space<vmem>>, vector<4x8x1xf32>,
      %cst_43 = arith.constant 0.000000e+00 : f32
      %38 = vector.broadcast %cst_43 : f32 to vector<4x8x1xf32>
      %c0_44 = arith.constant 0 : index
      %c0_45 = arith.constant 0 : index
      %c0_46 = arith.constant 0 : index
      %39 = vector.load %arg9[%c0_44, %c0_45, %c0_46] : memref<4x8x1xf32, #tpu.memory_space<vmem>>, vector<4x8x1xf32>
      tpu.vector_store %arg9[%c0_44, %c0_45, %c0_46], %38 {strides = array<i32>} : memref<4x8x1xf32, #tpu.memory_space<vmem>>, vector<4x8x1xf32>,
      %cst_47 = arith.constant 0.000000e+00 : f32
      %40 = vector.broadcast %cst_47 : f32 to vector<4x8x32xf32>
      %c0_48 = arith.constant 0 : index
      %c0_49 = arith.constant 0 : index
      %c0_50 = arith.constant 0 : index
      %41 = vector.load %arg10[%c0_48, %c0_49, %c0_50] : memref<4x8x32xf32, #tpu.memory_space<vmem>>, vector<4x8x32xf32>
      tpu.vector_store %arg10[%c0_48, %c0_49, %c0_50], %40 {strides = array<i32>} : memref<4x8x32xf32, #tpu.memory_space<vmem>>, vector<4x8x32xf32>,
    } else {
    }
    %c0 = arith.constant 0 : index
    %c0_1 = arith.constant 0 : index
    %c0_2 = arith.constant 0 : index
    %3 = vector.load %arg7[%c0, %c0_1, %c0_2] : memref<4x8x32xf32, #tpu.memory_space<vmem>>, vector<4x8x32xf32>
    %c0_3 = arith.constant 0 : index
    %c0_4 = arith.constant 0 : index
    %c0_5 = arith.constant 0 : index
    %4 = vector.load %arg4[%c0_3, %c0_4, %c0_5] : memref<4x8x32xf32, #tpu.memory_space<vmem>>, vector<4x8x32xf32>
    %c0_6 = arith.constant 0 : index
    %c0_7 = arith.constant 0 : index
    %c0_8 = arith.constant 0 : index
    %5 = vector.load %arg5[%c0_6, %c0_7, %c0_8] : memref<4x8x32xf32, #tpu.memory_space<vmem>>, vector<4x8x32xf32>
    %cst = arith.constant dense<0.000000e+00> : vector<4x8x8xf32>
    %6 = tpu.matmul %3, %4, %cst {dimension_numbers = #tpu.dot_dimension_numbers<[2], [2], [1], [1], [0, 0, 0, 1, 1, 1], [0], [0]>} : vector<4x8x32xf32>, vector<4x8x32xf32>, vector<4x8x8xf32> -> vector<4x8x8xf32>
    %c0_9 = arith.constant 0 : index
    %c0_10 = arith.constant 0 : index
    %c0_11 = arith.constant 0 : index
    %7 = vector.load %arg8[%c0_9, %c0_10, %c0_11] : memref<4x8x1xf32, #tpu.memory_space<vmem>>, vector<4x8x1xf32>
    %cst_12 = arith.constant dense<0xFF800000> : vector<4x8xf32>
    %8 = vector.multi_reduction <maximumf>, %6, %cst_12 [2] : vector<4x8x8xf32> to vector<4x8xf32>
    %9 = vector.shape_cast %8 : vector<4x8xf32> to vector<4x8x1xf32>
    %10 = arith.maximumf %7, %9 : vector<4x8x1xf32>
    %11 = arith.subf %7, %10 : vector<4x8x1xf32>
    %12 = math.exp %11 : vector<4x8x1xf32>
    %13 = vector.broadcast %10 : vector<4x8x1xf32> to vector<4x8x8xf32>
    %14 = arith.subf %6, %13 : vector<4x8x8xf32>
    %15 = math.exp %14 : vector<4x8x8xf32>
    %c0_13 = arith.constant 0 : index
    %c0_14 = arith.constant 0 : index
    %c0_15 = arith.constant 0 : index
    %16 = vector.load %arg9[%c0_13, %c0_14, %c0_15] : memref<4x8x1xf32, #tpu.memory_space<vmem>>, vector<4x8x1xf32>
    %17 = arith.mulf %12, %16 : vector<4x8x1xf32>
    %cst_16 = arith.constant dense<0.000000e+00> : vector<4x8xf32>
    %18 = vector.multi_reduction <add>, %15, %cst_16 [2] : vector<4x8x8xf32> to vector<4x8xf32>
    %19 = vector.shape_cast %18 : vector<4x8xf32> to vector<4x8x1xf32>
    %20 = arith.addf %17, %19 : vector<4x8x1xf32>
    %c0_17 = arith.constant 0 : index
    %c0_18 = arith.constant 0 : index
    %c0_19 = arith.constant 0 : index
    %21 = vector.load %arg9[%c0_17, %c0_18, %c0_19] : memref<4x8x1xf32, #tpu.memory_space<vmem>>, vector<4x8x1xf32>
    tpu.vector_store %arg9[%c0_17, %c0_18, %c0_19], %20 {strides = array<i32>} : memref<4x8x1xf32, #tpu.memory_space<vmem>>, vector<4x8x1xf32>,
    %cst_20 = arith.constant dense<0.000000e+00> : vector<4x8x32xf32>
    %22 = tpu.matmul %15, %5, %cst_20 {dimension_numbers = #tpu.dot_dimension_numbers<[2], [1], [1], [2], [0, 0, 0, 1, 1, 2], [0], [0]>} : vector<4x8x8xf32>, vector<4x8x32xf32>, vector<4x8x32xf32> -> vector<4x8x32xf32>
    %c0_21 = arith.constant 0 : index
    %c0_22 = arith.constant 0 : index
    %c0_23 = arith.constant 0 : index
    %23 = vector.load %arg10[%c0_21, %c0_22, %c0_23] : memref<4x8x32xf32, #tpu.memory_space<vmem>>, vector<4x8x32xf32>
    %24 = vector.broadcast %12 : vector<4x8x1xf32> to vector<4x8x32xf32>
    %25 = arith.mulf %24, %23 : vector<4x8x32xf32>
    %26 = arith.addf %25, %22 : vector<4x8x32xf32>
    %c0_24 = arith.constant 0 : index
    %c0_25 = arith.constant 0 : index
    %c0_26 = arith.constant 0 : index
    %27 = vector.load %arg10[%c0_24, %c0_25, %c0_26] : memref<4x8x32xf32, #tpu.memory_space<vmem>>, vector<4x8x32xf32>
    tpu.vector_store %arg10[%c0_24, %c0_25, %c0_26], %26 {strides = array<i32>} : memref<4x8x32xf32, #tpu.memory_space<vmem>>, vector<4x8x32xf32>,
    %c0_27 = arith.constant 0 : index
    %c0_28 = arith.constant 0 : index
    %c0_29 = arith.constant 0 : index
    %28 = vector.load %arg8[%c0_27, %c0_28, %c0_29] : memref<4x8x1xf32, #tpu.memory_space<vmem>>, vector<4x8x1xf32>
    tpu.vector_store %arg8[%c0_27, %c0_28, %c0_29], %10 {strides = array<i32>} : memref<4x8x1xf32, #tpu.memory_space<vmem>>, vector<4x8x1xf32>,
    %c0_i32_30 = arith.constant 0 : i32
    %29 = arith.cmpi eq, %arg2, %c0_i32_30 : i32
    %30 = arith.extui %29 : i1 to i32
    %c0_i32_31 = arith.constant 0 : i32
    %31 = arith.cmpi ne, %30, %c0_i32_31 : i32
    scf.if %31 {
      %c0_32 = arith.constant 0 : index
      %c0_33 = arith.constant 0 : index
      %c0_34 = arith.constant 0 : index
      %32 = vector.load %arg10[%c0_32, %c0_33, %c0_34] : memref<4x8x32xf32, #tpu.memory_space<vmem>>, vector<4x8x32xf32>
      %c0_35 = arith.constant 0 : index
      %c0_36 = arith.constant 0 : index
      %c0_37 = arith.constant 0 : index
      %33 = vector.load %arg9[%c0_35, %c0_36, %c0_37] : memref<4x8x1xf32, #tpu.memory_space<vmem>>, vector<4x8x1xf32>
      %34 = vector.broadcast %33 : vector<4x8x1xf32> to vector<4x8x32xf32>
      %35 = arith.divf %32, %34 : vector<4x8x32xf32>
      %c0_38 = arith.constant 0 : index
      %c0_39 = arith.constant 0 : index
      %c0_40 = arith.constant 0 : index
      %36 = vector.load %arg6[%c0_38, %c0_39, %c0_40] : memref<4x8x32xf32, #tpu.memory_space<vmem>>, vector<4x8x32xf32>
      tpu.vector_store %arg6[%c0_38, %c0_39, %c0_40], %35 {strides = array<i32>} : memref<4x8x32xf32, #tpu.memory_space<vmem>>, vector<4x8x32xf32>,
    } else {
    }
    return
  }
  func.func @transform_0(%arg0: i32, %arg1: i32, %arg2: i32) -> (i32, i32, i32) {
    %c0_i32 = arith.constant 0 : i32
    %c0_i32_0 = arith.constant 0 : i32
    return %arg0, %arg1, %c0_i32 : i32, i32, i32
  }
  func.func @transform_1(%arg0: i32, %arg1: i32, %arg2: i32) -> (i32, i32, i32) {
    %c0_i32 = arith.constant 0 : i32
    %c0_i32_0 = arith.constant 0 : i32
    return %arg0, %arg2, %c0_i32 : i32, i32, i32
  }
  func.func @transform_2(%arg0: i32, %arg1: i32, %arg2: i32) -> (i32, i32, i32) {
    %c0_i32 = arith.constant 0 : i32
    %c0_i32_0 = arith.constant 0 : i32
    return %arg0, %arg2, %c0_i32 : i32, i32, i32
  }
  func.func @transform_3(%arg0: i32, %arg1: i32, %arg2: i32) -> (i32, i32, i32) {
    %c0_i32 = arith.constant 0 : i32
    %c0_i32_0 = arith.constant 0 : i32
    return %arg0, %arg1, %c0_i32 : i32, i32, i32
  }
}

</mosaic_0001>

<llo_original>
// kernel: tpu_custom_call.1
$region0: #{tpu_custom_call.1}
  #allocation0 [shape = 'u32[]', space=smem, size = 0x4, offset = 0x4, fixed_abs, tag = 'smem constant byte address 0x4 - core index']
  #allocation1 [shape = 'u32[72,128]{1,0:T(1,128)}', space=vmem, size = 0x9000, scoped, tag = 'internal scratch']
  #allocation2 [shape = 'f32[4,8,32]{2,1,0:T(8,128)}', space=vmem, size = 0x4000, scoped, tag = 'scratch operand']
  #allocation3 [shape = 'f32[4,8,1]{2,1,0:T(8,128)}', space=vmem, size = 0x4000, scoped, tag = 'scratch operand']
  #allocation4 [shape = 'f32[4,8,1]{2,1,0:T(8,128)}', space=vmem, size = 0x4000, scoped, tag = 'scratch operand']
  #allocation5 [shape = 'f32[4,8,32]{2,1,0:T(8,128)}', space=vmem, size = 0x4000, scoped, tag = 'scratch operand']
  %s0 = inlined_call_operand.hbm [shape: f32[8,8,32], index: 0, kind: input, shape index: {}]
  %s1 = inlined_call_operand.hbm [shape: f32[8,8,32], index: 1, kind: input, shape index: {}]
  %s2 = inlined_call_operand.hbm [shape: f32[8,8,32], index: 2, kind: input, shape index: {}]
  %s3 = inlined_call_operand.hbm [shape: f32[8,8,32], index: 3, kind: output, shape index: {}]
  %s4 = sld [smem:[#allocation0]]
  $region65: #{tpu_custom_call.1} parent=0
    _
  %s6 = ssub.s32 1, %s4
  %s7 = scalar_select 0, %s6, %s4
  $region1: #{tpu_custom_call.1} parent=0
    #allocation6 [shape = 'u8[32768]{0}', space=vmem, size = 0x8000, scoped, tag = 'input window, operand 0']
    #allocation7 [shape = 's32[2]{0}', space=sflag, size = 0x8, scoped, tag = 'scoped memory for tpu_custom_call.1']
    #allocation8 [shape = 's32[2]{0}', space=sflag, size = 0x8, scoped, tag = 'scoped memory for tpu_custom_call.1']
    #allocation9 [shape = 'u8[32768]{0}', space=vmem, size = 0x8000, scoped, tag = 'input window, operand 1']
    #allocation10 [shape = 's32[2]{0}', space=sflag, size = 0x8, scoped, tag = 'scoped memory for tpu_custom_call.1']
    #allocation11 [shape = 'u8[32768]{0}', space=vmem, size = 0x8000, scoped, tag = 'input window, operand 2']
    #allocation12 [shape = 'u8[32768]{0}', space=vmem, size = 0x8000, scoped, tag = 'output window, operand 0']
    %8 = vsyncpa [#allocation7], 0
    %s9 = scalar_lea.sflag [#allocation7], 1
    %10 = vsyncpa %s9, 0
    %11 = vsyncpa [#allocation10], 0
    %s12 = scalar_lea.sflag [#allocation10], 1
    %13 = vsyncpa %s12, 0
    %14 = vsyncpa [#allocation8], 0
    %s15 = scalar_lea.sflag [#allocation8], 1
    %16 = vsyncpa %s15, 0
    loop: start=0, step=1, limit=4
    $region2: #{tpu_custom_call.1} parent=1 // loop_pre_header
      _
    $region3: #{tpu_custom_call.1} parent=1 // loop_header
      %s18 = sphi 0, %s22
      %p19 = scmp.ge.s32.totalorder %s18, 4
      %s25 = sphi 0, %s44
      %s26 = sphi 0, %s40
      %s27 = sphi 0, %s36
      %s28 = sphi 0, %s25
      %s29 = sphi 0, %s26
      %s30 = sphi 0, %s27
      %s31 = sphi 0, %s28
      %s32 = sphi 0, %s29
      %s33 = sphi 0, %s30
      %s49 = sphi 0, %s51
      %s52 = sphi 0, %s49
      %s53 = sphi 0, %s52
      %s69 = sphi 0, %s53
      %s77 = sphi 0, %s79
      %s80 = sphi 0, %s77
      %s81 = sphi 0, %s80
      %s97 = sphi 0, %s81
      %s105 = sphi 0, %s107
      %s108 = sphi 0, %s105
      %s109 = sphi 0, %s108
      %s125 = sphi 0, %s109
      %s133 = sphi 0, %s135
      %s136 = sphi 0, %s133
      %s137 = sphi 0, %s136
      %s153 = sphi 0, %s137
    $region4: #{tpu_custom_call.1} parent=1 // loop_header_branch
      %21 = sbr.rel (%p19) target = $region8
    $region5: #{tpu_custom_call.1} parent=1 // loop_body
      %s23 = ssub.s32 %s18, 1
      %s24 = ssub.s32 %s18, 2
      %s34 = sadd.s32 1, %s27
      %p35 = scmp.ge.s32.totalorder %s34, 1
      %s36 = scalar_select %p35, 0, %s34
      %s37 = sadd.s32 1, %s26
      %s38 = scalar_select %p35, %s37, %s26
      %p39 = scmp.ge.s32.totalorder %s38, 1
      %s40 = scalar_select %p39, 0, %s38
      %s41 = sadd.s32 1, %s25
      %s42 = scalar_select %p39, %s41, %s25
      %p43 = scmp.ge.s32.totalorder %s42, 2
      %s44 = scalar_select %p43, 0, %s42
      %s45 = ssub.s32 %s25, %s44
      %s46 = ssub.s32 %s26, %s40
      %s47 = sor.u32 %s45, %s46
      %p48 = scmp.eq.s32.totalorder %s47, 0
      %s50 = sadd.s32 %s49, 1
      %s51 = scalar_select %p48, %s49, %s50
      %p54 = pneg %p48
      %p55 = scmp.eq.s32.totalorder %s18, 1
      %p56 = por %p54, %p55
      %p57 = scmp.ne.s32.totalorder %s49, %s52
      %p58 = scmp.eq.s32.totalorder %s18, 0
      %p59 = por %p57, %p58
      %p60 = scmp.ne.s32.totalorder %s49, %s52
      %p61 = scmp.eq.s32.totalorder %s23, 1
      %p62 = por %p60, %p61
      %p63 = scmp.ne.s32.totalorder %s52, %s53
      %p64 = scmp.eq.s32.totalorder %s23, 0
      %p65 = por %p63, %p64
      %p66 = scmp.ne.s32.totalorder %s52, %s53
      %p67 = scmp.eq.s32.totalorder %s24, 1
      %p68 = por %p66, %p67
      %p70 = scmp.ne.s32.totalorder %s53, %s69
      %p71 = scmp.eq.s32.totalorder %s24, 0
      %p72 = por %p70, %p71
      %s73 = ssub.s32 %s25, %s44
      %s74 = ssub.s32 %s27, %s36
      %s75 = sor.u32 %s73, %s74
      %p76 = scmp.eq.s32.totalorder %s75, 0
      %s78 = sadd.s32 %s77, 1
      %s79 = scalar_select %p76, %s77, %s78
      %p82 = pneg %p76
      %p83 = scmp.eq.s32.totalorder %s18, 1
      %p84 = por %p82, %p83
      %p85 = scmp.ne.s32.totalorder %s77, %s80
      %p86 = scmp.eq.s32.totalorder %s18, 0
      %p87 = por %p85, %p86
      %p88 = scmp.ne.s32.totalorder %s77, %s80
      %p89 = scmp.eq.s32.totalorder %s23, 1
      %p90 = por %p88, %p89
      %p91 = scmp.ne.s32.totalorder %s80, %s81
      %p92 = scmp.eq.s32.totalorder %s23, 0
      %p93 = por %p91, %p92
      %p94 = scmp.ne.s32.totalorder %s80, %s81
      %p95 = scmp.eq.s32.totalorder %s24, 1
      %p96 = por %p94, %p95
      %p98 = scmp.ne.s32.totalorder %s81, %s97
      %p99 = scmp.eq.s32.totalorder %s24, 0
      %p100 = por %p98, %p99
      %s101 = ssub.s32 %s25, %s44
      %s102 = ssub.s32 %s27, %s36
      %s103 = sor.u32 %s101, %s102
      %p104 = scmp.eq.s32.totalorder %s103, 0
      %s106 = sadd.s32 %s105, 1
      %s107 = scalar_select %p104, %s105, %s106
      %p110 = pneg %p104
      %p111 = scmp.eq.s32.totalorder %s18, 1
      %p112 = por %p110, %p111
      %p113 = scmp.ne.s32.totalorder %s105, %s108
      %p114 = scmp.eq.s32.totalorder %s18, 0
      %p115 = por %p113, %p114
      %p116 = scmp.ne.s32.totalorder %s105, %s108
      %p117 = scmp.eq.s32.totalorder %s23, 1
      %p118 = por %p116, %p117
      %p119 = scmp.ne.s32.totalorder %s108, %s109
      %p120 = scmp.eq.s32.totalorder %s23, 0
      %p121 = por %p119, %p120
      %p122 = scmp.ne.s32.totalorder %s108, %s109
      %p123 = scmp.eq.s32.totalorder %s24, 1
      %p124 = por %p122, %p123
      %p126 = scmp.ne.s32.totalorder %s109, %s125
      %p127 = scmp.eq.s32.totalorder %s24, 0
      %p128 = por %p126, %p127
      %s129 = ssub.s32 %s25, %s44
      %s130 = ssub.s32 %s26, %s40
      %s131 = sor.u32 %s129, %s130
      %p132 = scmp.eq.s32.totalorder %s131, 0
      %s134 = sadd.s32 %s133, 1
      %s135 = scalar_select %p132, %s133, %s134
      %p138 = pneg %p132
      %p139 = scmp.eq.s32.totalorder %s18, 1
      %p140 = por %p138, %p139
      %p141 = scmp.ne.s32.totalorder %s133, %s136
      %p142 = scmp.eq.s32.totalorder %s18, 0
      %p143 = por %p141, %p142
      %p144 = scmp.ne.s32.totalorder %s133, %s136
      %p145 = scmp.eq.s32.totalorder %s23, 1
      %p146 = por %p144, %p145
      %p147 = scmp.ne.s32.totalorder %s136, %s137
      %p148 = scmp.eq.s32.totalorder %s23, 0
      %p149 = por %p147, %p148
      %p150 = scmp.ne.s32.totalorder %s136, %s137
      %p151 = scmp.eq.s32.totalorder %s24, 1
      %p152 = por %p150, %p151
      %p154 = scmp.ne.s32.totalorder %s137, %s153
      %p155 = scmp.eq.s32.totalorder %s24, 0
      %p156 = por %p154, %p155
      %p157 = scmp.le.s32.totalorder 1, %s18
      %p158 = scmp.lt.s32.totalorder %s18, 3
      %p159 = pnand %p157, %p158
      %p160 = pneg %p159
      // Predicated region
      $region9: #{tpu_custom_call.1} parent=5 // pred_check
        _
      $region10: #{tpu_custom_call.1} parent=5 // pred_check_branch
        %162 = sbr.rel (%p159) target = $region12
      $region11: #{tpu_custom_call.1} parent=5 // pred_region
        %s163 = ssub.s32 %s18, 1
      $region12: #{tpu_custom_call.1} parent=5 // pred_fallthru
        _
      %p164 = scmp.lt.s32.totalorder %s18, 2
      // Predicated region
      $region13: #{tpu_custom_call.1} parent=5 // pred_check
        %p165 = pneg %p164
      $region14: #{tpu_custom_call.1} parent=5 // pred_check_branch
        %167 = sbr.rel (%p165) target = $region16
      $region15: #{tpu_custom_call.1} parent=5 // pred_region
        // Predicated region
        $region17: #{tpu_custom_call.1} parent=15 // pred_check
          %p168 = pneg %p59
        $region18: #{tpu_custom_call.1} parent=15 // pred_check_branch
          %170 = sbr.rel (%p168) target = $region20
        $region19: #{tpu_custom_call.1} parent=15 // pred_region
          %s171 = sand.u32 %s49, 1
          %s172 = scalar_lea.sflag [#allocation7], %s171
          %s173 = sand.u32 %s49, 1
          %s174 = smul.addr %s173, 32
          %s175 = scalar_lea.vmem [#allocation6], %s174
          %s176 = smul.u32 4, %s25
          %178 = vsyncadd %s172, 0
          %s179 = sadd.s32 %s26, %s176
          %s180 = smul.addr %s179, 8
          %s181 = scalar_lea.hbm %s0, %s180
          %s182 = sshll.u32 %s181, 4
          %s183 = int_to_ptr.hbm [resolvable:$true] %s182
          %s184 = sshll.u32 %s175, 4
          %s185 = int_to_ptr.vmem [resolvable:$true] %s184
          %190 = dma.hbm_to_vmem [thread:$0]  %s183, 512, %s185, %s172, 128, 128, 8
        $region20: #{tpu_custom_call.1} parent=15 // pred_fallthru
          _
        // Predicated region
        $region21: #{tpu_custom_call.1} parent=15 // pred_check
          %p191 = pneg %p87
        $region22: #{tpu_custom_call.1} parent=15 // pred_check_branch
          %193 = sbr.rel (%p191) target = $region24
        $region23: #{tpu_custom_call.1} parent=15 // pred_region
          %s194 = sand.u32 %s18, 1
          %s195 = scalar_lea.sflag [#allocation10], %s194
          %s196 = sand.u32 %s77, 1
          %s197 = smul.addr %s196, 32
          %s198 = scalar_lea.vmem [#allocation9], %s197
          %s199 = smul.u32 4, %s25
          %201 = vsyncadd %s195, 0
          %s202 = sadd.s32 %s27, %s199
          %s203 = smul.addr %s202, 8
          %s204 = scalar_lea.hbm %s1, %s203
          %s205 = sshll.u32 %s204, 4
          %s206 = int_to_ptr.hbm [resolvable:$true] %s205
          %s207 = sshll.u32 %s198, 4
          %s208 = int_to_ptr.vmem [resolvable:$true] %s207
          %213 = dma.hbm_to_vmem [thread:$0]  %s206, 512, %s208, %s195, 128, 128, 8
        $region24: #{tpu_custom_call.1} parent=15 // pred_fallthru
          _
        // Predicated region
        $region25: #{tpu_custom_call.1} parent=15 // pred_check
          %p214 = pneg %p115
        $region26: #{tpu_custom_call.1} parent=15 // pred_check_branch
          %216 = sbr.rel (%p214) target = $region28
        $region27: #{tpu_custom_call.1} parent=15 // pred_region
          %s217 = sand.u32 %s18, 1
          %s218 = scalar_lea.sflag [#allocation10], %s217
          %s219 = sand.u32 %s105, 1
          %s220 = smul.addr %s219, 32
          %s221 = scalar_lea.vmem [#allocation11], %s220
          %s222 = smul.u32 4, %s25
          %224 = vsyncadd %s218, 0
          %s225 = sadd.s32 %s27, %s222
          %s226 = smul.addr %s225, 8
          %s227 = scalar_lea.hbm %s2, %s226
          %s228 = sshll.u32 %s227, 4
          %s229 = int_to_ptr.hbm [resolvable:$true] %s228
          %s230 = sshll.u32 %s221, 4
          %s231 = int_to_ptr.vmem [resolvable:$true] %s230
          %236 = dma.hbm_to_vmem [thread:$0]  %s229, 512, %s231, %s218, 128, 128, 8
        $region28: #{tpu_custom_call.1} parent=15 // pred_fallthru
          _
      $region16: #{tpu_custom_call.1} parent=5 // pred_fallthru
        _
      %p237 = scmp.le.s32.totalorder 1, %s18
      %p238 = scmp.lt.s32.totalorder %s18, 3
      %p239 = pnand %p237, %p238
      %p240 = pneg %p239
      // Predicated region
      $region29: #{tpu_custom_call.1} parent=5 // pred_check
        _
      $region30: #{tpu_custom_call.1} parent=5 // pred_check_branch
        %242 = sbr.rel (%p239) target = $region32
      $region31: #{tpu_custom_call.1} parent=5 // pred_region
        %s243 = ssub.s32 %s18, 1
        %s244 = sand.u32 %s52, 1
        %s245 = scalar_lea.sflag [#allocation7], %s244
        %s246 = sand.u32 %s52, 1
        %s247 = smul.addr %s246, 32
        %s248 = scalar_lea.vmem [#allocation6], %s247
        // Predicated region
        $region33: #{tpu_custom_call.1} parent=31 // pred_check
          %p249 = pneg %p65
        $region34: #{tpu_custom_call.1} parent=31 // pred_check_branch
          %251 = sbr.rel (%p249) target = $region36
        $region35: #{tpu_custom_call.1} parent=31 // pred_region
          %253 = dma.done %s245, 512
        $region36: #{tpu_custom_call.1} parent=31 // pred_fallthru
          _
        %s254 = sand.u32 %s23, 1
        %s255 = scalar_lea.sflag [#allocation10], %s254
        %s256 = sand.u32 %s80, 1
        %s257 = smul.addr %s256, 32
        %s258 = scalar_lea.vmem [#allocation9], %s257
        // Predicated region
        $region37: #{tpu_custom_call.1} parent=31 // pred_check
          %p259 = pneg %p93
        $region38: #{tpu_custom_call.1} parent=31 // pred_check_branch
          %261 = sbr.rel (%p259) target = $region40
        $region39: #{tpu_custom_call.1} parent=31 // pred_region
          %263 = dma.done %s255, 512
        $region40: #{tpu_custom_call.1} parent=31 // pred_fallthru
          _
        %s264 = sand.u32 %s23, 1
        %s265 = scalar_lea.sflag [#allocation10], %s264
        %s266 = sand.u32 %s108, 1
        %s267 = smul.addr %s266, 32
        %s268 = scalar_lea.vmem [#allocation11], %s267
        // Predicated region
        $region41: #{tpu_custom_call.1} parent=31 // pred_check
          %p269 = pneg %p121
        $region42: #{tpu_custom_call.1} parent=31 // pred_check_branch
          %271 = sbr.rel (%p269) target = $region44
        $region43: #{tpu_custom_call.1} parent=31 // pred_region
          %273 = dma.done %s265, 512
        $region44: #{tpu_custom_call.1} parent=31 // pred_fallthru
          _
        %s274 = sand.u32 %s52, 1
        %s275 = scalar_lea.sflag [#allocation7], %s274
        %s276 = sand.u32 %s52, 1
        %s277 = smul.addr %s276, 32
        %s278 = scalar_lea.vmem [#allocation6], %s277
        %p279 = pneg %p65
        %p280 = pneg %p62
        %s281 = sand.u32 %s23, 1
        %s282 = scalar_lea.sflag [#allocation10], %s281
        %s283 = sand.u32 %s80, 1
        %s284 = smul.addr %s283, 32
        %s285 = scalar_lea.vmem [#allocation9], %s284
        %p286 = pneg %p93
        %p287 = pneg %p90
        %s288 = sand.u32 %s23, 1
        %s289 = scalar_lea.sflag [#allocation10], %s288
        %s290 = sand.u32 %s108, 1
        %s291 = smul.addr %s290, 32
        %s292 = scalar_lea.vmem [#allocation11], %s291
        %p293 = pneg %p121
        %p294 = pneg %p118
        %p295 = pneg %p149
        %p296 = pneg %p146
        %s297 = sand.u32 %s136, 1
        %s298 = scalar_lea.sflag [#allocation8], %s297
        %s299 = sand.u32 %s136, 1
        %s300 = smul.addr %s299, 32
        %s301 = scalar_lea.vmem [#allocation12], %s300
        %s302 = smul.u32 4, %s28
        %s303 = smul.u32 4, %s28
        %s304 = smul.u32 4, %s28
        %s305 = smul.u32 4, %s28
        %p306 = scmp.eq.s32.totalorder %s30, 0
        // Predicated region
        $region45: #{tpu_custom_call.1} parent=31 // pred_check
          %p307 = pneg %p306
        $region46: #{tpu_custom_call.1} parent=31 // pred_check_branch
          %309 = sbr.rel (%p307) target = $region48
        $region47: #{tpu_custom_call.1} parent=31 // pred_region
          %v310 = vld [vmem:[%s248] sm:$0xff]
          %v311 = vld [vmem:[%s248 + $0x8] sm:$0xff]
          %v312 = vld [vmem:[%s248 + $0x10] sm:$0xff]
          %v313 = vld [vmem:[%s248 + $0x18] sm:$0xff]
          %v314 = vmul.f32 %v310, 5.656854
          %v315 = vmul.f32 %v311, 5.656854
          %v316 = vmul.f32 %v312, 5.656854
          %v317 = vmul.f32 %v313, 5.656854
          %vm318 = vcmask 261120
          %319 = vst.msk [vmem:[#allocation2] sm:$0xff] %vm318, %v314
          %320 = vst.msk [vmem:[#allocation2 + $0x8] sm:$0xff] %vm318, %v315
          %321 = vst.msk [vmem:[#allocation2 + $0x10] sm:$0xff] %vm318, %v316
          %322 = vst.msk [vmem:[#allocation2 + $0x18] sm:$0xff] %vm318, %v317
          %vm323 = vcmask 7168
          %324 = vst.msk [vmem:[#allocation3] sm:$0xff] %vm323, -inf
          %325 = vst.msk [vmem:[#allocation3 + $0x8] sm:$0xff] %vm323, -inf
          %326 = vst.msk [vmem:[#allocation3 + $0x10] sm:$0xff] %vm323, -inf
          %327 = vst.msk [vmem:[#allocation3 + $0x18] sm:$0xff] %vm323, -inf
          %328 = vst.msk [vmem:[#allocation4] sm:$0xff] %vm323, 0.0
          %329 = vst.msk [vmem:[#allocation4 + $0x8] sm:$0xff] %vm323, 0.0
          %330 = vst.msk [vmem:[#allocation4 + $0x10] sm:$0xff] %vm323, 0.0
          %331 = vst.msk [vmem:[#allocation4 + $0x18] sm:$0xff] %vm323, 0.0
          %332 = vst.msk [vmem:[#allocation5] sm:$0xff] %vm318, 0.0
          %333 = vst.msk [vmem:[#allocation5 + $0x8] sm:$0xff] %vm318, 0.0
          %334 = vst.msk [vmem:[#allocation5 + $0x10] sm:$0xff] %vm318, 0.0
          %335 = vst.msk [vmem:[#allocation5 + $0x18] sm:$0xff] %vm318, 0.0
        $region48: #{tpu_custom_call.1} parent=31 // pred_fallthru
          _
        %v336 = vld [vmem:[#allocation2] sm:$0xff]
        %v337 = vld [vmem:[#allocation2 + $0x8] sm:$0xff]
        %v338 = vld [vmem:[#allocation2 + $0x10] sm:$0xff]
        %v339 = vld [vmem:[#allocation2 + $0x18] sm:$0xff]
        %v340 = vld [vmem:[%s258] sm:$0xff]
        %v341 = vld [vmem:[%s258 + $0x8] sm:$0xff]
        %v342 = vld [vmem:[%s258 + $0x10] sm:$0xff]
        %v343 = vld [vmem:[%s258 + $0x18] sm:$0xff]
        %v344 = vld [vmem:[%s268] sm:$0xff]
        %v345 = vld [vmem:[%s268 + $0x8] sm:$0xff]
        %v346 = vld [vmem:[%s268 + $0x10] sm:$0xff]
        %v347 = vld [vmem:[%s268 + $0x18] sm:$0xff]
        %vm348 = vcmask 261120
        %v350 = vsel %vm348, %v336, 0
        %v353 = vsel %vm348, %v340, 0
        %355 = vmatpush.xpose.msra.mxu0 0.0
        %356 = vmatpush.xpose.msra.mxu0 0.0
        %357 = vmatpush.xpose.msra.mxu0 0.0
        %358 = vmatpush.xpose.msra.mxu0 0.0
        %359 = vmatpush.xpose.msra.mxu0 0.0
        %360 = vmatpush.xpose.msra.mxu0 0.0
        %361 = vmatpush.xpose.msra.mxu0 0.0
        %362 = vmatpush.xpose.msra.mxu0 0.0
        %363 = vmatpush.xpose.msra.mxu0 0.0
        %364 = vmatpush.xpose.msra.mxu0 0.0
        %365 = vmatpush.xpose.msra.mxu0 0.0
        %366 = vmatpush.xpose.msra.mxu0 0.0
        %367 = vmatpush.xpose.msra.mxu0 0.0
        %368 = vmatpush.xpose.msra.mxu0 0.0
        %369 = vmatpush.xpose.msra.mxu0 0.0
        %v370 = vand.u32 %v353, 4294901760
        %371 = vmatpush.xpose.msra.mxu0 %v370
        %v372 = vand.u32 %v350, 4294901760
        %v373 = vsub.f32 %v350, %v372
        %v374 = vand.u32 %v373, 4294901760
        %v375 = vsub.f32 %v373, %v374
        %v376 = vand.u32 %v375, 4294901760
        %377 = vmatmul.f32.gmra.mxu0 %v376
        %v378 = vpop.f32.mrf.mxu0
        %v379 = vadd.f32 0.0, %v378
        %380 = vdwg.mxu0
        %381 = vmatpush.xpose.msra.mxu0 0.0
        %382 = vmatpush.xpose.msra.mxu0 0.0
        %383 = vmatpush.xpose.msra.mxu0 0.0
        %384 = vmatpush.xpose.msra.mxu0 0.0
        %385 = vmatpush.xpose.msra.mxu0 0.0
        %386 = vmatpush.xpose.msra.mxu0 0.0
        %387 = vmatpush.xpose.msra.mxu0 0.0
        %388 = vmatpush.xpose.msra.mxu0 0.0
        %389 = vmatpush.xpose.msra.mxu0 0.0
        %390 = vmatpush.xpose.msra.mxu0 0.0
        %391 = vmatpush.xpose.msra.mxu0 0.0
        %392 = vmatpush.xpose.msra.mxu0 0.0
        %393 = vmatpush.xpose.msra.mxu0 0.0
        %394 = vmatpush.xpose.msra.mxu0 0.0
        %395 = vmatpush.xpose.msra.mxu0 0.0
        %v396 = vand.u32 %v353, 4294901760
        %v397 = vsub.f32 %v353, %v396
        %v398 = vand.u32 %v397, 4294901760
        %v399 = vsub.f32 %v397, %v398
        %v400 = vand.u32 %v399, 4294901760
        %401 = vmatpush.xpose.msra.mxu0 %v400
        %v402 = vand.u32 %v350, 4294901760
        %403 = vmatmul.f32.gmra.mxu0 %v402
        %v404 = vpop.f32.mrf.mxu0
        %v405 = vadd.f32 %v379, %v404
        %406 = vdwg.mxu0
        %407 = vmatpush.xpose.msra.mxu0 0.0
        %408 = vmatpush.xpose.msra.mxu0 0.0
        %409 = vmatpush.xpose.msra.mxu0 0.0
        %410 = vmatpush.xpose.msra.mxu0 0.0
        %411 = vmatpush.xpose.msra.mxu0 0.0
        %412 = vmatpush.xpose.msra.mxu0 0.0
        %413 = vmatpush.xpose.msra.mxu0 0.0
        %414 = vmatpush.xpose.msra.mxu0 0.0
        %415 = vmatpush.xpose.msra.mxu0 0.0
        %416 = vmatpush.xpose.msra.mxu0 0.0
        %417 = vmatpush.xpose.msra.mxu0 0.0
        %418 = vmatpush.xpose.msra.mxu0 0.0
        %419 = vmatpush.xpose.msra.mxu0 0.0
        %420 = vmatpush.xpose.msra.mxu0 0.0
        %421 = vmatpush.xpose.msra.mxu0 0.0
        %v422 = vand.u32 %v353, 4294901760
        %v423 = vsub.f32 %v353, %v422
        %424 = vmatpush.xpose.msra.mxu0 %v423
        %v425 = vand.u32 %v350, 4294901760
        %v426 = vsub.f32 %v350, %v425
        %427 = vmatmul.f32.gmra.mxu0 %v426
        %v428 = vpop.f32.mrf.mxu0
        %v429 = vadd.f32 %v405, %v428
        %430 = vdwg.mxu0
        %431 = vmatpush.xpose.msra.mxu0 0.0
        %432 = vmatpush.xpose.msra.mxu0 0.0
        %433 = vmatpush.xpose.msra.mxu0 0.0
        %434 = vmatpush.xpose.msra.mxu0 0.0
        %435 = vmatpush.xpose.msra.mxu0 0.0
        %436 = vmatpush.xpose.msra.mxu0 0.0
        %437 = vmatpush.xpose.msra.mxu0 0.0
        %438 = vmatpush.xpose.msra.mxu0 0.0
        %439 = vmatpush.xpose.msra.mxu0 0.0
        %440 = vmatpush.xpose.msra.mxu0 0.0
        %441 = vmatpush.xpose.msra.mxu0 0.0
        %442 = vmatpush.xpose.msra.mxu0 0.0
        %443 = vmatpush.xpose.msra.mxu0 0.0
        %444 = vmatpush.xpose.msra.mxu0 0.0
        %445 = vmatpush.xpose.msra.mxu0 0.0
        %v446 = vand.u32 %v353, 4294901760
        %447 = vmatpush.xpose.msra.mxu0 %v446
        %v448 = vand.u32 %v350, 4294901760
        %v449 = vsub.f32 %v350, %v448
        %v450 = vand.u32 %v449, 4294901760
        %451 = vmatmul.f32.gmra.mxu0 %v450
        %v452 = vpop.f32.mrf.mxu0
        %v453 = vadd.f32 %v429, %v452
        %454 = vdwg.mxu0
        %455 = vmatpush.xpose.msra.mxu0 0.0
        %456 = vmatpush.xpose.msra.mxu0 0.0
        %457 = vmatpush.xpose.msra.mxu0 0.0
        %458 = vmatpush.xpose.msra.mxu0 0.0
        %459 = vmatpush.xpose.msra.mxu0 0.0
        %460 = vmatpush.xpose.msra.mxu0 0.0
        %461 = vmatpush.xpose.msra.mxu0 0.0
        %462 = vmatpush.xpose.msra.mxu0 0.0
        %463 = vmatpush.xpose.msra.mxu0 0.0
        %464 = vmatpush.xpose.msra.mxu0 0.0
        %465 = vmatpush.xpose.msra.mxu0 0.0
        %466 = vmatpush.xpose.msra.mxu0 0.0
        %467 = vmatpush.xpose.msra.mxu0 0.0
        %468 = vmatpush.xpose.msra.mxu0 0.0
        %469 = vmatpush.xpose.msra.mxu0 0.0
        %v470 = vand.u32 %v353, 4294901760
        %v471 = vsub.f32 %v353, %v470
        %v472 = vand.u32 %v471, 4294901760
        %473 = vmatpush.xpose.msra.mxu0 %v472
        %v474 = vand.u32 %v350, 4294901760
        %475 = vmatmul.f32.gmra.mxu0 %v474
        %v476 = vpop.f32.mrf.mxu0
        %v477 = vadd.f32 %v453, %v476
        %478 = vdwg.mxu0
        %479 = vmatpush.xpose.msra.mxu0 0.0
        %480 = vmatpush.xpose.msra.mxu0 0.0
        %481 = vmatpush.xpose.msra.mxu0 0.0
        %482 = vmatpush.xpose.msra.mxu0 0.0
        %483 = vmatpush.xpose.msra.mxu0 0.0
        %484 = vmatpush.xpose.msra.mxu0 0.0
        %485 = vmatpush.xpose.msra.mxu0 0.0
        %486 = vmatpush.xpose.msra.mxu0 0.0
        %487 = vmatpush.xpose.msra.mxu0 0.0
        %488 = vmatpush.xpose.msra.mxu0 0.0
        %489 = vmatpush.xpose.msra.mxu0 0.0
        %490 = vmatpush.xpose.msra.mxu0 0.0
        %491 = vmatpush.xpose.msra.mxu0 0.0
        %492 = vmatpush.xpose.msra.mxu0 0.0
        %493 = vmatpush.xpose.msra.mxu0 0.0
        %v494 = vand.u32 %v353, 4294901760
        %495 = vmatpush.xpose.msra.mxu0 %v494
        %v496 = vand.u32 %v350, 4294901760
        %497 = vmatmul.f32.gmra.mxu0 %v496
        %v498 = vpop.f32.mrf.mxu0
        %v499 = vadd.f32 %v477, %v498
        %500 = vdwg.mxu0
        %v502 = vsel %vm348, %v337, 0
        %v505 = vsel %vm348, %v341, 0
        %507 = vmatpush.xpose.msra.mxu0 0.0
        %508 = vmatpush.xpose.msra.mxu0 0.0
        %509 = vmatpush.xpose.msra.mxu0 0.0
        %510 = vmatpush.xpose.msra.mxu0 0.0
        %511 = vmatpush.xpose.msra.mxu0 0.0
        %512 = vmatpush.xpose.msra.mxu0 0.0
        %513 = vmatpush.xpose.msra.mxu0 0.0
        %514 = vmatpush.xpose.msra.mxu0 0.0
        %515 = vmatpush.xpose.msra.mxu0 0.0
        %516 = vmatpush.xpose.msra.mxu0 0.0
        %517 = vmatpush.xpose.msra.mxu0 0.0
        %518 = vmatpush.xpose.msra.mxu0 0.0
        %519 = vmatpush.xpose.msra.mxu0 0.0
        %520 = vmatpush.xpose.msra.mxu0 0.0
        %521 = vmatpush.xpose.msra.mxu0 0.0
        %v522 = vand.u32 %v505, 4294901760
        %523 = vmatpush.xpose.msra.mxu0 %v522
        %v524 = vand.u32 %v502, 4294901760
        %v525 = vsub.f32 %v502, %v524
        %v526 = vand.u32 %v525, 4294901760
        %v527 = vsub.f32 %v525, %v526
        %v528 = vand.u32 %v527, 4294901760
        %529 = vmatmul.f32.gmra.mxu0 %v528
        %v530 = vpop.f32.mrf.mxu0
        %v531 = vadd.f32 0.0, %v530
        %532 = vdwg.mxu0
        %533 = vmatpush.xpose.msra.mxu0 0.0
        %534 = vmatpush.xpose.msra.mxu0 0.0
        %535 = vmatpush.xpose.msra.mxu0 0.0
        %536 = vmatpush.xpose.msra.mxu0 0.0
        %537 = vmatpush.xpose.msra.mxu0 0.0
        %538 = vmatpush.xpose.msra.mxu0 0.0
        %539 = vmatpush.xpose.msra.mxu0 0.0
        %540 = vmatpush.xpose.msra.mxu0 0.0
        %541 = vmatpush.xpose.msra.mxu0 0.0
        %542 = vmatpush.xpose.msra.mxu0 0.0
        %543 = vmatpush.xpose.msra.mxu0 0.0
        %544 = vmatpush.xpose.msra.mxu0 0.0
        %545 = vmatpush.xpose.msra.mxu0 0.0
        %546 = vmatpush.xpose.msra.mxu0 0.0
        %547 = vmatpush.xpose.msra.mxu0 0.0
        %v548 = vand.u32 %v505, 4294901760
        %v549 = vsub.f32 %v505, %v548
        %v550 = vand.u32 %v549, 4294901760
        %v551 = vsub.f32 %v549, %v550
        %v552 = vand.u32 %v551, 4294901760
        %553 = vmatpush.xpose.msra.mxu0 %v552
        %v554 = vand.u32 %v502, 4294901760
        %555 = vmatmul.f32.gmra.mxu0 %v554
        %v556 = vpop.f32.mrf.mxu0
        %v557 = vadd.f32 %v531, %v556
        %558 = vdwg.mxu0
        %559 = vmatpush.xpose.msra.mxu0 0.0
        %560 = vmatpush.xpose.msra.mxu0 0.0
        %561 = vmatpush.xpose.msra.mxu0 0.0
        %562 = vmatpush.xpose.msra.mxu0 0.0
        %563 = vmatpush.xpose.msra.mxu0 0.0
        %564 = vmatpush.xpose.msra.mxu0 0.0
        %565 = vmatpush.xpose.msra.mxu0 0.0
        %566 = vmatpush.xpose.msra.mxu0 0.0
        %567 = vmatpush.xpose.msra.mxu0 0.0
        %568 = vmatpush.xpose.msra.mxu0 0.0
        %569 = vmatpush.xpose.msra.mxu0 0.0
        %570 = vmatpush.xpose.msra.mxu0 0.0
        %571 = vmatpush.xpose.msra.mxu0 0.0
        %572 = vmatpush.xpose.msra.mxu0 0.0
        %573 = vmatpush.xpose.msra.mxu0 0.0
        %v574 = vand.u32 %v505, 4294901760
        %v575 = vsub.f32 %v505, %v574
        %576 = vmatpush.xpose.msra.mxu0 %v575
        %v577 = vand.u32 %v502, 4294901760
        %v578 = vsub.f32 %v502, %v577
        %579 = vmatmul.f32.gmra.mxu0 %v578
        %v580 = vpop.f32.mrf.mxu0
        %v581 = vadd.f32 %v557, %v580
        %582 = vdwg.mxu0
        %583 = vmatpush.xpose.msra.mxu0 0.0
        %584 = vmatpush.xpose.msra.mxu0 0.0
        %585 = vmatpush.xpose.msra.mxu0 0.0
        %586 = vmatpush.xpose.msra.mxu0 0.0
        %587 = vmatpush.xpose.msra.mxu0 0.0
        %588 = vmatpush.xpose.msra.mxu0 0.0
        %589 = vmatpush.xpose.msra.mxu0 0.0
        %590 = vmatpush.xpose.msra.mxu0 0.0
        %591 = vmatpush.xpose.msra.mxu0 0.0
        %592 = vmatpush.xpose.msra.mxu0 0.0
        %593 = vmatpush.xpose.msra.mxu0 0.0
        %594 = vmatpush.xpose.msra.mxu0 0.0
        %595 = vmatpush.xpose.msra.mxu0 0.0
        %596 = vmatpush.xpose.msra.mxu0 0.0
        %597 = vmatpush.xpose.msra.mxu0 0.0
        %v598 = vand.u32 %v505, 4294901760
        %599 = vmatpush.xpose.msra.mxu0 %v598
        %v600 = vand.u32 %v502, 4294901760
        %v601 = vsub.f32 %v502, %v600
        %v602 = vand.u32 %v601, 4294901760
        %603 = vmatmul.f32.gmra.mxu0 %v602
        %v604 = vpop.f32.mrf.mxu0
        %v605 = vadd.f32 %v581, %v604
        %606 = vdwg.mxu0
        %607 = vmatpush.xpose.msra.mxu0 0.0
        %608 = vmatpush.xpose.msra.mxu0 0.0
        %609 = vmatpush.xpose.msra.mxu0 0.0
        %610 = vmatpush.xpose.msra.mxu0 0.0
        %611 = vmatpush.xpose.msra.mxu0 0.0
        %612 = vmatpush.xpose.msra.mxu0 0.0
        %613 = vmatpush.xpose.msra.mxu0 0.0
        %614 = vmatpush.xpose.msra.mxu0 0.0
        %615 = vmatpush.xpose.msra.mxu0 0.0
        %616 = vmatpush.xpose.msra.mxu0 0.0
        %617 = vmatpush.xpose.msra.mxu0 0.0
        %618 = vmatpush.xpose.msra.mxu0 0.0
        %619 = vmatpush.xpose.msra.mxu0 0.0
        %620 = vmatpush.xpose.msra.mxu0 0.0
        %621 = vmatpush.xpose.msra.mxu0 0.0
        %v622 = vand.u32 %v505, 4294901760
        %v623 = vsub.f32 %v505, %v622
        %v624 = vand.u32 %v623, 4294901760
        %625 = vmatpush.xpose.msra.mxu0 %v624
        %v626 = vand.u32 %v502, 4294901760
        %627 = vmatmul.f32.gmra.mxu0 %v626
        %v628 = vpop.f32.mrf.mxu0
        %v629 = vadd.f32 %v605, %v628
        %630 = vdwg.mxu0
        %631 = vmatpush.xpose.msra.mxu0 0.0
        %632 = vmatpush.xpose.msra.mxu0 0.0
        %633 = vmatpush.xpose.msra.mxu0 0.0
        %634 = vmatpush.xpose.msra.mxu0 0.0
        %635 = vmatpush.xpose.msra.mxu0 0.0
        %636 = vmatpush.xpose.msra.mxu0 0.0
        %637 = vmatpush.xpose.msra.mxu0 0.0
        %638 = vmatpush.xpose.msra.mxu0 0.0
        %639 = vmatpush.xpose.msra.mxu0 0.0
        %640 = vmatpush.xpose.msra.mxu0 0.0
        %641 = vmatpush.xpose.msra.mxu0 0.0
        %642 = vmatpush.xpose.msra.mxu0 0.0
        %643 = vmatpush.xpose.msra.mxu0 0.0
        %644 = vmatpush.xpose.msra.mxu0 0.0
        %645 = vmatpush.xpose.msra.mxu0 0.0
        %v646 = vand.u32 %v505, 4294901760
        %647 = vmatpush.xpose.msra.mxu0 %v646
        %v648 = vand.u32 %v502, 4294901760
        %649 = vmatmul.f32.gmra.mxu0 %v648
        %v650 = vpop.f32.mrf.mxu0
        %v651 = vadd.f32 %v629, %v650
        %652 = vdwg.mxu0
        %v654 = vsel %vm348, %v338, 0
        %v657 = vsel %vm348, %v342, 0
        %659 = vmatpush.xpose.msra.mxu0 0.0
        %660 = vmatpush.xpose.msra.mxu0 0.0
        %661 = vmatpush.xpose.msra.mxu0 0.0
        %662 = vmatpush.xpose.msra.mxu0 0.0
        %663 = vmatpush.xpose.msra.mxu0 0.0
        %664 = vmatpush.xpose.msra.mxu0 0.0
        %665 = vmatpush.xpose.msra.mxu0 0.0
        %666 = vmatpush.xpose.msra.mxu0 0.0
        %667 = vmatpush.xpose.msra.mxu0 0.0
        %668 = vmatpush.xpose.msra.mxu0 0.0
        %669 = vmatpush.xpose.msra.mxu0 0.0
        %670 = vmatpush.xpose.msra.mxu0 0.0
        %671 = vmatpush.xpose.msra.mxu0 0.0
        %672 = vmatpush.xpose.msra.mxu0 0.0
        %673 = vmatpush.xpose.msra.mxu0 0.0
        %v674 = vand.u32 %v657, 4294901760
        %675 = vmatpush.xpose.msra.mxu0 %v674
        %v676 = vand.u32 %v654, 4294901760
        %v677 = vsub.f32 %v654, %v676
        %v678 = vand.u32 %v677, 4294901760
        %v679 = vsub.f32 %v677, %v678
        %v680 = vand.u32 %v679, 4294901760
        %681 = vmatmul.f32.gmra.mxu0 %v680
        %v682 = vpop.f32.mrf.mxu0
        %v683 = vadd.f32 0.0, %v682
        %684 = vdwg.mxu0
        %685 = vmatpush.xpose.msra.mxu0 0.0
        %686 = vmatpush.xpose.msra.mxu0 0.0
        %687 = vmatpush.xpose.msra.mxu0 0.0
        %688 = vmatpush.xpose.msra.mxu0 0.0
        %689 = vmatpush.xpose.msra.mxu0 0.0
        %690 = vmatpush.xpose.msra.mxu0 0.0
        %691 = vmatpush.xpose.msra.mxu0 0.0
        %692 = vmatpush.xpose.msra.mxu0 0.0
        %693 = vmatpush.xpose.msra.mxu0 0.0
        %694 = vmatpush.xpose.msra.mxu0 0.0
        %695 = vmatpush.xpose.msra.mxu0 0.0
        %696 = vmatpush.xpose.msra.mxu0 0.0
        %697 = vmatpush.xpose.msra.mxu0 0.0
        %698 = vmatpush.xpose.msra.mxu0 0.0
        %699 = vmatpush.xpose.msra.mxu0 0.0
        %v700 = vand.u32 %v657, 4294901760
        %v701 = vsub.f32 %v657, %v700
        %v702 = vand.u32 %v701, 4294901760
        %v703 = vsub.f32 %v701, %v702
        %v704 = vand.u32 %v703, 4294901760
        %705 = vmatpush.xpose.msra.mxu0 %v704
        %v706 = vand.u32 %v654, 4294901760
        %707 = vmatmul.f32.gmra.mxu0 %v706
        %v708 = vpop.f32.mrf.mxu0
        %v709 = vadd.f32 %v683, %v708
        %710 = vdwg.mxu0
        %711 = vmatpush.xpose.msra.mxu0 0.0
        %712 = vmatpush.xpose.msra.mxu0 0.0
        %713 = vmatpush.xpose.msra.mxu0 0.0
        %714 = vmatpush.xpose.msra.mxu0 0.0
        %715 = vmatpush.xpose.msra.mxu0 0.0
        %716 = vmatpush.xpose.msra.mxu0 0.0
        %717 = vmatpush.xpose.msra.mxu0 0.0
        %718 = vmatpush.xpose.msra.mxu0 0.0
        %719 = vmatpush.xpose.msra.mxu0 0.0
        %720 = vmatpush.xpose.msra.mxu0 0.0
        %721 = vmatpush.xpose.msra.mxu0 0.0
        %722 = vmatpush.xpose.msra.mxu0 0.0
        %723 = vmatpush.xpose.msra.mxu0 0.0
        %724 = vmatpush.xpose.msra.mxu0 0.0
        %725 = vmatpush.xpose.msra.mxu0 0.0
        %v726 = vand.u32 %v657, 4294901760
        %v727 = vsub.f32 %v657, %v726
        %728 = vmatpush.xpose.msra.mxu0 %v727
        %v729 = vand.u32 %v654, 4294901760
        %v730 = vsub.f32 %v654, %v729
        %731 = vmatmul.f32.gmra.mxu0 %v730
        %v732 = vpop.f32.mrf.mxu0
        %v733 = vadd.f32 %v709, %v732
        %734 = vdwg.mxu0
        %735 = vmatpush.xpose.msra.mxu0 0.0
        %736 = vmatpush.xpose.msra.mxu0 0.0
        %737 = vmatpush.xpose.msra.mxu0 0.0
        %738 = vmatpush.xpose.msra.mxu0 0.0
        %739 = vmatpush.xpose.msra.mxu0 0.0
        %740 = vmatpush.xpose.msra.mxu0 0.0
        %741 = vmatpush.xpose.msra.mxu0 0.0
        %742 = vmatpush.xpose.msra.mxu0 0.0
        %743 = vmatpush.xpose.msra.mxu0 0.0
        %744 = vmatpush.xpose.msra.mxu0 0.0
        %745 = vmatpush.xpose.msra.mxu0 0.0
        %746 = vmatpush.xpose.msra.mxu0 0.0
        %747 = vmatpush.xpose.msra.mxu0 0.0
        %748 = vmatpush.xpose.msra.mxu0 0.0
        %749 = vmatpush.xpose.msra.mxu0 0.0
        %v750 = vand.u32 %v657, 4294901760
        %751 = vmatpush.xpose.msra.mxu0 %v750
        %v752 = vand.u32 %v654, 4294901760
        %v753 = vsub.f32 %v654, %v752
        %v754 = vand.u32 %v753, 4294901760
        %755 = vmatmul.f32.gmra.mxu0 %v754
        %v756 = vpop.f32.mrf.mxu0
        %v757 = vadd.f32 %v733, %v756
        %758 = vdwg.mxu0
        %759 = vmatpush.xpose.msra.mxu0 0.0
        %760 = vmatpush.xpose.msra.mxu0 0.0
        %761 = vmatpush.xpose.msra.mxu0 0.0
        %762 = vmatpush.xpose.msra.mxu0 0.0
        %763 = vmatpush.xpose.msra.mxu0 0.0
        %764 = vmatpush.xpose.msra.mxu0 0.0
        %765 = vmatpush.xpose.msra.mxu0 0.0
        %766 = vmatpush.xpose.msra.mxu0 0.0
        %767 = vmatpush.xpose.msra.mxu0 0.0
        %768 = vmatpush.xpose.msra.mxu0 0.0
        %769 = vmatpush.xpose.msra.mxu0 0.0
        %770 = vmatpush.xpose.msra.mxu0 0.0
        %771 = vmatpush.xpose.msra.mxu0 0.0
        %772 = vmatpush.xpose.msra.mxu0 0.0
        %773 = vmatpush.xpose.msra.mxu0 0.0
        %v774 = vand.u32 %v657, 4294901760
        %v775 = vsub.f32 %v657, %v774
        %v776 = vand.u32 %v775, 4294901760
        %777 = vmatpush.xpose.msra.mxu0 %v776
        %v778 = vand.u32 %v654, 4294901760
        %779 = vmatmul.f32.gmra.mxu0 %v778
        %v780 = vpop.f32.mrf.mxu0
        %v781 = vadd.f32 %v757, %v780
        %782 = vdwg.mxu0
        %783 = vmatpush.xpose.msra.mxu0 0.0
        %784 = vmatpush.xpose.msra.mxu0 0.0
        %785 = vmatpush.xpose.msra.mxu0 0.0
        %786 = vmatpush.xpose.msra.mxu0 0.0
        %787 = vmatpush.xpose.msra.mxu0 0.0
        %788 = vmatpush.xpose.msra.mxu0 0.0
        %789 = vmatpush.xpose.msra.mxu0 0.0
        %790 = vmatpush.xpose.msra.mxu0 0.0
        %791 = vmatpush.xpose.msra.mxu0 0.0
        %792 = vmatpush.xpose.msra.mxu0 0.0
        %793 = vmatpush.xpose.msra.mxu0 0.0
        %794 = vmatpush.xpose.msra.mxu0 0.0
        %795 = vmatpush.xpose.msra.mxu0 0.0
        %796 = vmatpush.xpose.msra.mxu0 0.0
        %797 = vmatpush.xpose.msra.mxu0 0.0
        %v798 = vand.u32 %v657, 4294901760
        %799 = vmatpush.xpose.msra.mxu0 %v798
        %v800 = vand.u32 %v654, 4294901760
        %801 = vmatmul.f32.gmra.mxu0 %v800
        %v802 = vpop.f32.mrf.mxu0
        %v803 = vadd.f32 %v781, %v802
        %804 = vdwg.mxu0
        %v806 = vsel %vm348, %v339, 0
        %v809 = vsel %vm348, %v343, 0
        %811 = vmatpush.xpose.msra.mxu0 0.0
        %812 = vmatpush.xpose.msra.mxu0 0.0
        %813 = vmatpush.xpose.msra.mxu0 0.0
        %814 = vmatpush.xpose.msra.mxu0 0.0
        %815 = vmatpush.xpose.msra.mxu0 0.0
        %816 = vmatpush.xpose.msra.mxu0 0.0
        %817 = vmatpush.xpose.msra.mxu0 0.0
        %818 = vmatpush.xpose.msra.mxu0 0.0
        %819 = vmatpush.xpose.msra.mxu0 0.0
        %820 = vmatpush.xpose.msra.mxu0 0.0
        %821 = vmatpush.xpose.msra.mxu0 0.0
        %822 = vmatpush.xpose.msra.mxu0 0.0
        %823 = vmatpush.xpose.msra.mxu0 0.0
        %824 = vmatpush.xpose.msra.mxu0 0.0
        %825 = vmatpush.xpose.msra.mxu0 0.0
        %v826 = vand.u32 %v809, 4294901760
        %827 = vmatpush.xpose.msra.mxu0 %v826
        %v828 = vand.u32 %v806, 4294901760
        %v829 = vsub.f32 %v806, %v828
        %v830 = vand.u32 %v829, 4294901760
        %v831 = vsub.f32 %v829, %v830
        %v832 = vand.u32 %v831, 4294901760
        %833 = vmatmul.f32.gmra.mxu0 %v832
        %v834 = vpop.f32.mrf.mxu0
        %v835 = vadd.f32 0.0, %v834
        %836 = vdwg.mxu0
        %837 = vmatpush.xpose.msra.mxu0 0.0
        %838 = vmatpush.xpose.msra.mxu0 0.0
        %839 = vmatpush.xpose.msra.mxu0 0.0
        %840 = vmatpush.xpose.msra.mxu0 0.0
        %841 = vmatpush.xpose.msra.mxu0 0.0
        %842 = vmatpush.xpose.msra.mxu0 0.0
        %843 = vmatpush.xpose.msra.mxu0 0.0
        %844 = vmatpush.xpose.msra.mxu0 0.0
        %845 = vmatpush.xpose.msra.mxu0 0.0
        %846 = vmatpush.xpose.msra.mxu0 0.0
        %847 = vmatpush.xpose.msra.mxu0 0.0
        %848 = vmatpush.xpose.msra.mxu0 0.0
        %849 = vmatpush.xpose.msra.mxu0 0.0
        %850 = vmatpush.xpose.msra.mxu0 0.0
        %851 = vmatpush.xpose.msra.mxu0 0.0
        %v852 = vand.u32 %v809, 4294901760
        %v853 = vsub.f32 %v809, %v852
        %v854 = vand.u32 %v853, 4294901760
        %v855 = vsub.f32 %v853, %v854
        %v856 = vand.u32 %v855, 4294901760
        %857 = vmatpush.xpose.msra.mxu0 %v856
        %v858 = vand.u32 %v806, 4294901760
        %859 = vmatmul.f32.gmra.mxu0 %v858
        %v860 = vpop.f32.mrf.mxu0
        %v861 = vadd.f32 %v835, %v860
        %862 = vdwg.mxu0
        %863 = vmatpush.xpose.msra.mxu0 0.0
        %864 = vmatpush.xpose.msra.mxu0 0.0
        %865 = vmatpush.xpose.msra.mxu0 0.0
        %866 = vmatpush.xpose.msra.mxu0 0.0
        %867 = vmatpush.xpose.msra.mxu0 0.0
        %868 = vmatpush.xpose.msra.mxu0 0.0
        %869 = vmatpush.xpose.msra.mxu0 0.0
        %870 = vmatpush.xpose.msra.mxu0 0.0
        %871 = vmatpush.xpose.msra.mxu0 0.0
        %872 = vmatpush.xpose.msra.mxu0 0.0
        %873 = vmatpush.xpose.msra.mxu0 0.0
        %874 = vmatpush.xpose.msra.mxu0 0.0
        %875 = vmatpush.xpose.msra.mxu0 0.0
        %876 = vmatpush.xpose.msra.mxu0 0.0
        %877 = vmatpush.xpose.msra.mxu0 0.0
        %v878 = vand.u32 %v809, 4294901760
        %v879 = vsub.f32 %v809, %v878
        %880 = vmatpush.xpose.msra.mxu0 %v879
        %v881 = vand.u32 %v806, 4294901760
        %v882 = vsub.f32 %v806, %v881
        %883 = vmatmul.f32.gmra.mxu0 %v882
        %v884 = vpop.f32.mrf.mxu0
        %v885 = vadd.f32 %v861, %v884
        %886 = vdwg.mxu0
        %887 = vmatpush.xpose.msra.mxu0 0.0
        %888 = vmatpush.xpose.msra.mxu0 0.0
        %889 = vmatpush.xpose.msra.mxu0 0.0
        %890 = vmatpush.xpose.msra.mxu0 0.0
        %891 = vmatpush.xpose.msra.mxu0 0.0
        %892 = vmatpush.xpose.msra.mxu0 0.0
        %893 = vmatpush.xpose.msra.mxu0 0.0
        %894 = vmatpush.xpose.msra.mxu0 0.0
        %895 = vmatpush.xpose.msra.mxu0 0.0
        %896 = vmatpush.xpose.msra.mxu0 0.0
        %897 = vmatpush.xpose.msra.mxu0 0.0
        %898 = vmatpush.xpose.msra.mxu0 0.0
        %899 = vmatpush.xpose.msra.mxu0 0.0
        %900 = vmatpush.xpose.msra.mxu0 0.0
        %901 = vmatpush.xpose.msra.mxu0 0.0
        %v902 = vand.u32 %v809, 4294901760
        %903 = vmatpush.xpose.msra.mxu0 %v902
        %v904 = vand.u32 %v806, 4294901760
        %v905 = vsub.f32 %v806, %v904
        %v906 = vand.u32 %v905, 4294901760
        %907 = vmatmul.f32.gmra.mxu0 %v906
        %v908 = vpop.f32.mrf.mxu0
        %v909 = vadd.f32 %v885, %v908
        %910 = vdwg.mxu0
        %911 = vmatpush.xpose.msra.mxu0 0.0
        %912 = vmatpush.xpose.msra.mxu0 0.0
        %913 = vmatpush.xpose.msra.mxu0 0.0
        %914 = vmatpush.xpose.msra.mxu0 0.0
        %915 = vmatpush.xpose.msra.mxu0 0.0
        %916 = vmatpush.xpose.msra.mxu0 0.0
        %917 = vmatpush.xpose.msra.mxu0 0.0
        %918 = vmatpush.xpose.msra.mxu0 0.0
        %919 = vmatpush.xpose.msra.mxu0 0.0
        %920 = vmatpush.xpose.msra.mxu0 0.0
        %921 = vmatpush.xpose.msra.mxu0 0.0
        %922 = vmatpush.xpose.msra.mxu0 0.0
        %923 = vmatpush.xpose.msra.mxu0 0.0
        %924 = vmatpush.xpose.msra.mxu0 0.0
        %925 = vmatpush.xpose.msra.mxu0 0.0
        %v926 = vand.u32 %v809, 4294901760
        %v927 = vsub.f32 %v809, %v926
        %v928 = vand.u32 %v927, 4294901760
        %929 = vmatpush.xpose.msra.mxu0 %v928
        %v930 = vand.u32 %v806, 4294901760
        %931 = vmatmul.f32.gmra.mxu0 %v930
        %v932 = vpop.f32.mrf.mxu0
        %v933 = vadd.f32 %v909, %v932
        %934 = vdwg.mxu0
        %935 = vmatpush.xpose.msra.mxu0 0.0
        %936 = vmatpush.xpose.msra.mxu0 0.0
        %937 = vmatpush.xpose.msra.mxu0 0.0
        %938 = vmatpush.xpose.msra.mxu0 0.0
        %939 = vmatpush.xpose.msra.mxu0 0.0
        %940 = vmatpush.xpose.msra.mxu0 0.0
        %941 = vmatpush.xpose.msra.mxu0 0.0
        %942 = vmatpush.xpose.msra.mxu0 0.0
        %943 = vmatpush.xpose.msra.mxu0 0.0
        %944 = vmatpush.xpose.msra.mxu0 0.0
        %945 = vmatpush.xpose.msra.mxu0 0.0
        %946 = vmatpush.xpose.msra.mxu0 0.0
        %947 = vmatpush.xpose.msra.mxu0 0.0
        %948 = vmatpush.xpose.msra.mxu0 0.0
        %949 = vmatpush.xpose.msra.mxu0 0.0
        %v950 = vand.u32 %v809, 4294901760
        %951 = vmatpush.xpose.msra.mxu0 %v950
        %v952 = vand.u32 %v806, 4294901760
        %953 = vmatmul.f32.gmra.mxu0 %v952
        %v954 = vpop.f32.mrf.mxu0
        %v955 = vadd.f32 %v933, %v954
        %956 = vdwg.mxu0
        %v957 = vld [vmem:[#allocation3] sm:$0xff]
        %v958 = vld [vmem:[#allocation3 + $0x8] sm:$0xff]
        %v959 = vld [vmem:[#allocation3 + $0x10] sm:$0xff]
        %v960 = vld [vmem:[#allocation3 + $0x18] sm:$0xff]
        %vm961 = vcmask 64512
        %v962 = vsel %vm961, %v499, -inf
        %963 = vmax.xlane.f32.xlu0 %v962
        %v964 = vpop.xlane.xlu0 %963
        %v965 = vsel %vm961, %v651, -inf
        %966 = vmax.xlane.f32.xlu0 %v965
        %v967 = vpop.xlane.xlu0 %966
        %v968 = vsel %vm961, %v803, -inf
        %969 = vmax.xlane.f32.xlu0 %v968
        %v970 = vpop.xlane.xlu0 %969
        %v971 = vsel %vm961, %v955, -inf
        %972 = vmax.xlane.f32.xlu0 %v971
        %v973 = vpop.xlane.xlu0 %972
        %v974 = vmax.f32 %v957, %v964
        %v975 = vmax.f32 %v958, %v967
        %v976 = vmax.f32 %v959, %v970
        %v977 = vmax.f32 %v960, %v973
        %v978 = vsub.f32 %v957, %v974
        %v979 = vsub.f32 %v958, %v975
        %v980 = vsub.f32 %v959, %v976
        %v981 = vsub.f32 %v960, %v977
        %v982 = vmul.f32 %v978, 1.442695
        %v983 = vpow.pop %v982
        %v984 = vmul.f32 %v979, 1.442695
        %v985 = vpow.pop %v984
        %v986 = vmul.f32 %v980, 1.442695
        %v987 = vpow.pop %v986
        %v988 = vmul.f32 %v981, 1.442695
        %v989 = vpow.pop %v988
        %991 = vset.pattern.permute.xlu0 0
        %992 = vperm.xlu0 %991, %v974
        %v993 = vpop.permute.xlu0 %992
        %996 = vset.pattern.permute.xlu0 0
        %997 = vperm.xlu0 %996, %v975
        %v998 = vpop.permute.xlu0 %997
        %1001 = vset.pattern.permute.xlu0 0
        %1002 = vperm.xlu0 %1001, %v976
        %v1003 = vpop.permute.xlu0 %1002
        %1006 = vset.pattern.permute.xlu0 0
        %1007 = vperm.xlu0 %1006, %v977
        %v1008 = vpop.permute.xlu0 %1007
        %v1010 = vsub.f32 %v499, %v993
        %v1011 = vsub.f32 %v651, %v998
        %v1012 = vsub.f32 %v803, %v1003
        %v1013 = vsub.f32 %v955, %v1008
        %v1014 = vmul.f32 %v1010, 1.442695
        %v1015 = vpow.pop %v1014
        %v1016 = vmul.f32 %v1011, 1.442695
        %v1017 = vpow.pop %v1016
        %v1018 = vmul.f32 %v1012, 1.442695
        %v1019 = vpow.pop %v1018
        %v1020 = vmul.f32 %v1013, 1.442695
        %v1021 = vpow.pop %v1020
        %v1022 = vld [vmem:[#allocation4] sm:$0xff]
        %v1023 = vld [vmem:[#allocation4 + $0x8] sm:$0xff]
        %v1024 = vld [vmem:[#allocation4 + $0x10] sm:$0xff]
        %v1025 = vld [vmem:[#allocation4 + $0x18] sm:$0xff]
        %v1026 = vmul.f32 %v983, %v1022
        %v1027 = vmul.f32 %v985, %v1023
        %v1028 = vmul.f32 %v987, %v1024
        %v1029 = vmul.f32 %v989, %v1025
        %v1030 = vsel %vm961, %v1015, 0.0
        %1031 = vadd.xlane.f32.xlu0 %v1030
        %v1032 = vpop.xlane.xlu0 %1031
        %v1033 = vsel %vm961, %v1017, 0.0
        %1034 = vadd.xlane.f32.xlu0 %v1033
        %v1035 = vpop.xlane.xlu0 %1034
        %v1036 = vsel %vm961, %v1019, 0.0
        %1037 = vadd.xlane.f32.xlu0 %v1036
        %v1038 = vpop.xlane.xlu0 %1037
        %v1039 = vsel %vm961, %v1021, 0.0
        %1040 = vadd.xlane.f32.xlu0 %v1039
        %v1041 = vpop.xlane.xlu0 %1040
        %v1042 = vadd.f32 %v1026, %v1032
        %v1043 = vadd.f32 %v1027, %v1035
        %v1044 = vadd.f32 %v1028, %v1038
        %v1045 = vadd.f32 %v1029, %v1041
        %vm1046 = vcmask 7168
        %1047 = vst.msk [vmem:[#allocation4] sm:$0xff] %vm1046, %v1042
        %1048 = vst.msk [vmem:[#allocation4 + $0x8] sm:$0xff] %vm1046, %v1043
        %1049 = vst.msk [vmem:[#allocation4 + $0x10] sm:$0xff] %vm1046, %v1044
        %1050 = vst.msk [vmem:[#allocation4 + $0x18] sm:$0xff] %vm1046, %v1045
        %v1052 = vsel %vm961, %v1015, 0
        %1054 = vmatpush.msra.mxu0 0.0
        %1055 = vmatpush.msra.mxu0 0.0
        %1056 = vmatpush.msra.mxu0 0.0
        %1057 = vmatpush.msra.mxu0 0.0
        %1058 = vmatpush.msra.mxu0 0.0
        %1059 = vmatpush.msra.mxu0 0.0
        %1060 = vmatpush.msra.mxu0 0.0
        %1061 = vmatpush.msra.mxu0 0.0
        %1062 = vmatpush.msra.mxu0 0.0
        %1063 = vmatpush.msra.mxu0 0.0
        %1064 = vmatpush.msra.mxu0 0.0
        %1065 = vmatpush.msra.mxu0 0.0
        %1066 = vmatpush.msra.mxu0 0.0
        %1067 = vmatpush.msra.mxu0 0.0
        %1068 = vmatpush.msra.mxu0 0.0
        %v1069 = vand.u32 %v344, 4294901760
        %1070 = vmatpush.msra.mxu0 %v1069
        %v1071 = vand.u32 %v1052, 4294901760
        %v1072 = vsub.f32 %v1052, %v1071
        %v1073 = vand.u32 %v1072, 4294901760
        %v1074 = vsub.f32 %v1072, %v1073
        %v1075 = vand.u32 %v1074, 4294901760
        %1076 = vmatmul.f32.gmra.mxu0 %v1075
        %v1077 = vpop.f32.mrf.mxu0
        %v1078 = vadd.f32 0.0, %v1077
        %1079 = vdwg.mxu0
        %1080 = vmatpush.msra.mxu0 0.0
        %1081 = vmatpush.msra.mxu0 0.0
        %1082 = vmatpush.msra.mxu0 0.0
        %1083 = vmatpush.msra.mxu0 0.0
        %1084 = vmatpush.msra.mxu0 0.0
        %1085 = vmatpush.msra.mxu0 0.0
        %1086 = vmatpush.msra.mxu0 0.0
        %1087 = vmatpush.msra.mxu0 0.0
        %1088 = vmatpush.msra.mxu0 0.0
        %1089 = vmatpush.msra.mxu0 0.0
        %1090 = vmatpush.msra.mxu0 0.0
        %1091 = vmatpush.msra.mxu0 0.0
        %1092 = vmatpush.msra.mxu0 0.0
        %1093 = vmatpush.msra.mxu0 0.0
        %1094 = vmatpush.msra.mxu0 0.0
        %v1095 = vand.u32 %v344, 4294901760
        %v1096 = vsub.f32 %v344, %v1095
        %v1097 = vand.u32 %v1096, 4294901760
        %v1098 = vsub.f32 %v1096, %v1097
        %v1099 = vand.u32 %v1098, 4294901760
        %1100 = vmatpush.msra.mxu0 %v1099
        %v1101 = vand.u32 %v1052, 4294901760
        %1102 = vmatmul.f32.gmra.mxu0 %v1101
        %v1103 = vpop.f32.mrf.mxu0
        %v1104 = vadd.f32 %v1078, %v1103
        %1105 = vdwg.mxu0
        %1106 = vmatpush.msra.mxu0 0.0
        %1107 = vmatpush.msra.mxu0 0.0
        %1108 = vmatpush.msra.mxu0 0.0
        %1109 = vmatpush.msra.mxu0 0.0
        %1110 = vmatpush.msra.mxu0 0.0
        %1111 = vmatpush.msra.mxu0 0.0
        %1112 = vmatpush.msra.mxu0 0.0
        %1113 = vmatpush.msra.mxu0 0.0
        %1114 = vmatpush.msra.mxu0 0.0
        %1115 = vmatpush.msra.mxu0 0.0
        %1116 = vmatpush.msra.mxu0 0.0
        %1117 = vmatpush.msra.mxu0 0.0
        %1118 = vmatpush.msra.mxu0 0.0
        %1119 = vmatpush.msra.mxu0 0.0
        %1120 = vmatpush.msra.mxu0 0.0
        %v1121 = vand.u32 %v344, 4294901760
        %v1122 = vsub.f32 %v344, %v1121
        %1123 = vmatpush.msra.mxu0 %v1122
        %v1124 = vand.u32 %v1052, 4294901760
        %v1125 = vsub.f32 %v1052, %v1124
        %1126 = vmatmul.f32.gmra.mxu0 %v1125
        %v1127 = vpop.f32.mrf.mxu0
        %v1128 = vadd.f32 %v1104, %v1127
        %1129 = vdwg.mxu0
        %1130 = vmatpush.msra.mxu0 0.0
        %1131 = vmatpush.msra.mxu0 0.0
        %1132 = vmatpush.msra.mxu0 0.0
        %1133 = vmatpush.msra.mxu0 0.0
        %1134 = vmatpush.msra.mxu0 0.0
        %1135 = vmatpush.msra.mxu0 0.0
        %1136 = vmatpush.msra.mxu0 0.0
        %1137 = vmatpush.msra.mxu0 0.0
        %1138 = vmatpush.msra.mxu0 0.0
        %1139 = vmatpush.msra.mxu0 0.0
        %1140 = vmatpush.msra.mxu0 0.0
        %1141 = vmatpush.msra.mxu0 0.0
        %1142 = vmatpush.msra.mxu0 0.0
        %1143 = vmatpush.msra.mxu0 0.0
        %1144 = vmatpush.msra.mxu0 0.0
        %v1145 = vand.u32 %v344, 4294901760
        %1146 = vmatpush.msra.mxu0 %v1145
        %v1147 = vand.u32 %v1052, 4294901760
        %v1148 = vsub.f32 %v1052, %v1147
        %v1149 = vand.u32 %v1148, 4294901760
        %1150 = vmatmul.f32.gmra.mxu0 %v1149
        %v1151 = vpop.f32.mrf.mxu0
        %v1152 = vadd.f32 %v1128, %v1151
        %1153 = vdwg.mxu0
        %1154 = vmatpush.msra.mxu0 0.0
        %1155 = vmatpush.msra.mxu0 0.0
        %1156 = vmatpush.msra.mxu0 0.0
        %1157 = vmatpush.msra.mxu0 0.0
        %1158 = vmatpush.msra.mxu0 0.0
        %1159 = vmatpush.msra.mxu0 0.0
        %1160 = vmatpush.msra.mxu0 0.0
        %1161 = vmatpush.msra.mxu0 0.0
        %1162 = vmatpush.msra.mxu0 0.0
        %1163 = vmatpush.msra.mxu0 0.0
        %1164 = vmatpush.msra.mxu0 0.0
        %1165 = vmatpush.msra.mxu0 0.0
        %1166 = vmatpush.msra.mxu0 0.0
        %1167 = vmatpush.msra.mxu0 0.0
        %1168 = vmatpush.msra.mxu0 0.0
        %v1169 = vand.u32 %v344, 4294901760
        %v1170 = vsub.f32 %v344, %v1169
        %v1171 = vand.u32 %v1170, 4294901760
        %1172 = vmatpush.msra.mxu0 %v1171
        %v1173 = vand.u32 %v1052, 4294901760
        %1174 = vmatmul.f32.gmra.mxu0 %v1173
        %v1175 = vpop.f32.mrf.mxu0
        %v1176 = vadd.f32 %v1152, %v1175
        %1177 = vdwg.mxu0
        %1178 = vmatpush.msra.mxu0 0.0
        %1179 = vmatpush.msra.mxu0 0.0
        %1180 = vmatpush.msra.mxu0 0.0
        %1181 = vmatpush.msra.mxu0 0.0
        %1182 = vmatpush.msra.mxu0 0.0
        %1183 = vmatpush.msra.mxu0 0.0
        %1184 = vmatpush.msra.mxu0 0.0
        %1185 = vmatpush.msra.mxu0 0.0
        %1186 = vmatpush.msra.mxu0 0.0
        %1187 = vmatpush.msra.mxu0 0.0
        %1188 = vmatpush.msra.mxu0 0.0
        %1189 = vmatpush.msra.mxu0 0.0
        %1190 = vmatpush.msra.mxu0 0.0
        %1191 = vmatpush.msra.mxu0 0.0
        %1192 = vmatpush.msra.mxu0 0.0
        %v1193 = vand.u32 %v344, 4294901760
        %1194 = vmatpush.msra.mxu0 %v1193
        %v1195 = vand.u32 %v1052, 4294901760
        %1196 = vmatmul.f32.gmra.mxu0 %v1195
        %v1197 = vpop.f32.mrf.mxu0
        %v1198 = vadd.f32 %v1176, %v1197
        %1199 = vdwg.mxu0
        %v1201 = vsel %vm961, %v1017, 0
        %1203 = vmatpush.msra.mxu0 0.0
        %1204 = vmatpush.msra.mxu0 0.0
        %1205 = vmatpush.msra.mxu0 0.0
        %1206 = vmatpush.msra.mxu0 0.0
        %1207 = vmatpush.msra.mxu0 0.0
        %1208 = vmatpush.msra.mxu0 0.0
        %1209 = vmatpush.msra.mxu0 0.0
        %1210 = vmatpush.msra.mxu0 0.0
        %1211 = vmatpush.msra.mxu0 0.0
        %1212 = vmatpush.msra.mxu0 0.0
        %1213 = vmatpush.msra.mxu0 0.0
        %1214 = vmatpush.msra.mxu0 0.0
        %1215 = vmatpush.msra.mxu0 0.0
        %1216 = vmatpush.msra.mxu0 0.0
        %1217 = vmatpush.msra.mxu0 0.0
        %v1218 = vand.u32 %v345, 4294901760
        %1219 = vmatpush.msra.mxu0 %v1218
        %v1220 = vand.u32 %v1201, 4294901760
        %v1221 = vsub.f32 %v1201, %v1220
        %v1222 = vand.u32 %v1221, 4294901760
        %v1223 = vsub.f32 %v1221, %v1222
        %v1224 = vand.u32 %v1223, 4294901760
        %1225 = vmatmul.f32.gmra.mxu0 %v1224
        %v1226 = vpop.f32.mrf.mxu0
        %v1227 = vadd.f32 0.0, %v1226
        %1228 = vdwg.mxu0
        %1229 = vmatpush.msra.mxu0 0.0
        %1230 = vmatpush.msra.mxu0 0.0
        %1231 = vmatpush.msra.mxu0 0.0
        %1232 = vmatpush.msra.mxu0 0.0
        %1233 = vmatpush.msra.mxu0 0.0
        %1234 = vmatpush.msra.mxu0 0.0
        %1235 = vmatpush.msra.mxu0 0.0
        %1236 = vmatpush.msra.mxu0 0.0
        %1237 = vmatpush.msra.mxu0 0.0
        %1238 = vmatpush.msra.mxu0 0.0
        %1239 = vmatpush.msra.mxu0 0.0
        %1240 = vmatpush.msra.mxu0 0.0
        %1241 = vmatpush.msra.mxu0 0.0
        %1242 = vmatpush.msra.mxu0 0.0
        %1243 = vmatpush.msra.mxu0 0.0
        %v1244 = vand.u32 %v345, 4294901760
        %v1245 = vsub.f32 %v345, %v1244
        %v1246 = vand.u32 %v1245, 4294901760
        %v1247 = vsub.f32 %v1245, %v1246
        %v1248 = vand.u32 %v1247, 4294901760
        %1249 = vmatpush.msra.mxu0 %v1248
        %v1250 = vand.u32 %v1201, 4294901760
        %1251 = vmatmul.f32.gmra.mxu0 %v1250
        %v1252 = vpop.f32.mrf.mxu0
        %v1253 = vadd.f32 %v1227, %v1252
        %1254 = vdwg.mxu0
        %1255 = vmatpush.msra.mxu0 0.0
        %1256 = vmatpush.msra.mxu0 0.0
        %1257 = vmatpush.msra.mxu0 0.0
        %1258 = vmatpush.msra.mxu0 0.0
        %1259 = vmatpush.msra.mxu0 0.0
        %1260 = vmatpush.msra.mxu0 0.0
        %1261 = vmatpush.msra.mxu0 0.0
        %1262 = vmatpush.msra.mxu0 0.0
        %1263 = vmatpush.msra.mxu0 0.0
        %1264 = vmatpush.msra.mxu0 0.0
        %1265 = vmatpush.msra.mxu0 0.0
        %1266 = vmatpush.msra.mxu0 0.0
        %1267 = vmatpush.msra.mxu0 0.0
        %1268 = vmatpush.msra.mxu0 0.0
        %1269 = vmatpush.msra.mxu0 0.0
        %v1270 = vand.u32 %v345, 4294901760
        %v1271 = vsub.f32 %v345, %v1270
        %1272 = vmatpush.msra.mxu0 %v1271
        %v1273 = vand.u32 %v1201, 4294901760
        %v1274 = vsub.f32 %v1201, %v1273
        %1275 = vmatmul.f32.gmra.mxu0 %v1274
        %v1276 = vpop.f32.mrf.mxu0
        %v1277 = vadd.f32 %v1253, %v1276
        %1278 = vdwg.mxu0
        %1279 = vmatpush.msra.mxu0 0.0
        %1280 = vmatpush.msra.mxu0 0.0
        %1281 = vmatpush.msra.mxu0 0.0
        %1282 = vmatpush.msra.mxu0 0.0
        %1283 = vmatpush.msra.mxu0 0.0
        %1284 = vmatpush.msra.mxu0 0.0
        %1285 = vmatpush.msra.mxu0 0.0
        %1286 = vmatpush.msra.mxu0 0.0
        %1287 = vmatpush.msra.mxu0 0.0
        %1288 = vmatpush.msra.mxu0 0.0
        %1289 = vmatpush.msra.mxu0 0.0
        %1290 = vmatpush.msra.mxu0 0.0
        %1291 = vmatpush.msra.mxu0 0.0
        %1292 = vmatpush.msra.mxu0 0.0
        %1293 = vmatpush.msra.mxu0 0.0
        %v1294 = vand.u32 %v345, 4294901760
        %1295 = vmatpush.msra.mxu0 %v1294
        %v1296 = vand.u32 %v1201, 4294901760
        %v1297 = vsub.f32 %v1201, %v1296
        %v1298 = vand.u32 %v1297, 4294901760
        %1299 = vmatmul.f32.gmra.mxu0 %v1298
        %v1300 = vpop.f32.mrf.mxu0
        %v1301 = vadd.f32 %v1277, %v1300
        %1302 = vdwg.mxu0
        %1303 = vmatpush.msra.mxu0 0.0
        %1304 = vmatpush.msra.mxu0 0.0
        %1305 = vmatpush.msra.mxu0 0.0
        %1306 = vmatpush.msra.mxu0 0.0
        %1307 = vmatpush.msra.mxu0 0.0
        %1308 = vmatpush.msra.mxu0 0.0
        %1309 = vmatpush.msra.mxu0 0.0
        %1310 = vmatpush.msra.mxu0 0.0
        %1311 = vmatpush.msra.mxu0 0.0
        %1312 = vmatpush.msra.mxu0 0.0
        %1313 = vmatpush.msra.mxu0 0.0
        %1314 = vmatpush.msra.mxu0 0.0
        %1315 = vmatpush.msra.mxu0 0.0
        %1316 = vmatpush.msra.mxu0 0.0
        %1317 = vmatpush.msra.mxu0 0.0
        %v1318 = vand.u32 %v345, 4294901760
        %v1319 = vsub.f32 %v345, %v1318
        %v1320 = vand.u32 %v1319, 4294901760
        %1321 = vmatpush.msra.mxu0 %v1320
        %v1322 = vand.u32 %v1201, 4294901760
        %1323 = vmatmul.f32.gmra.mxu0 %v1322
        %v1324 = vpop.f32.mrf.mxu0
        %v1325 = vadd.f32 %v1301, %v1324
        %1326 = vdwg.mxu0
        %1327 = vmatpush.msra.mxu0 0.0
        %1328 = vmatpush.msra.mxu0 0.0
        %1329 = vmatpush.msra.mxu0 0.0
        %1330 = vmatpush.msra.mxu0 0.0
        %1331 = vmatpush.msra.mxu0 0.0
        %1332 = vmatpush.msra.mxu0 0.0
        %1333 = vmatpush.msra.mxu0 0.0
        %1334 = vmatpush.msra.mxu0 0.0
        %1335 = vmatpush.msra.mxu0 0.0
        %1336 = vmatpush.msra.mxu0 0.0
        %1337 = vmatpush.msra.mxu0 0.0
        %1338 = vmatpush.msra.mxu0 0.0
        %1339 = vmatpush.msra.mxu0 0.0
        %1340 = vmatpush.msra.mxu0 0.0
        %1341 = vmatpush.msra.mxu0 0.0
        %v1342 = vand.u32 %v345, 4294901760
        %1343 = vmatpush.msra.mxu0 %v1342
        %v1344 = vand.u32 %v1201, 4294901760
        %1345 = vmatmul.f32.gmra.mxu0 %v1344
        %v1346 = vpop.f32.mrf.mxu0
        %v1347 = vadd.f32 %v1325, %v1346
        %1348 = vdwg.mxu0
        %v1350 = vsel %vm961, %v1019, 0
        %1352 = vmatpush.msra.mxu0 0.0
        %1353 = vmatpush.msra.mxu0 0.0
        %1354 = vmatpush.msra.mxu0 0.0
        %1355 = vmatpush.msra.mxu0 0.0
        %1356 = vmatpush.msra.mxu0 0.0
        %1357 = vmatpush.msra.mxu0 0.0
        %1358 = vmatpush.msra.mxu0 0.0
        %1359 = vmatpush.msra.mxu0 0.0
        %1360 = vmatpush.msra.mxu0 0.0
        %1361 = vmatpush.msra.mxu0 0.0
        %1362 = vmatpush.msra.mxu0 0.0
        %1363 = vmatpush.msra.mxu0 0.0
        %1364 = vmatpush.msra.mxu0 0.0
        %1365 = vmatpush.msra.mxu0 0.0
        %1366 = vmatpush.msra.mxu0 0.0
        %v1367 = vand.u32 %v346, 4294901760
        %1368 = vmatpush.msra.mxu0 %v1367
        %v1369 = vand.u32 %v1350, 4294901760
        %v1370 = vsub.f32 %v1350, %v1369
        %v1371 = vand.u32 %v1370, 4294901760
        %v1372 = vsub.f32 %v1370, %v1371
        %v1373 = vand.u32 %v1372, 4294901760
        %1374 = vmatmul.f32.gmra.mxu0 %v1373
        %v1375 = vpop.f32.mrf.mxu0
        %v1376 = vadd.f32 0.0, %v1375
        %1377 = vdwg.mxu0
        %1378 = vmatpush.msra.mxu0 0.0
        %1379 = vmatpush.msra.mxu0 0.0
        %1380 = vmatpush.msra.mxu0 0.0
        %1381 = vmatpush.msra.mxu0 0.0
        %1382 = vmatpush.msra.mxu0 0.0
        %1383 = vmatpush.msra.mxu0 0.0
        %1384 = vmatpush.msra.mxu0 0.0
        %1385 = vmatpush.msra.mxu0 0.0
        %1386 = vmatpush.msra.mxu0 0.0
        %1387 = vmatpush.msra.mxu0 0.0
        %1388 = vmatpush.msra.mxu0 0.0
        %1389 = vmatpush.msra.mxu0 0.0
        %1390 = vmatpush.msra.mxu0 0.0
        %1391 = vmatpush.msra.mxu0 0.0
        %1392 = vmatpush.msra.mxu0 0.0
        %v1393 = vand.u32 %v346, 4294901760
        %v1394 = vsub.f32 %v346, %v1393
        %v1395 = vand.u32 %v1394, 4294901760
        %v1396 = vsub.f32 %v1394, %v1395
        %v1397 = vand.u32 %v1396, 4294901760
        %1398 = vmatpush.msra.mxu0 %v1397
        %v1399 = vand.u32 %v1350, 4294901760
        %1400 = vmatmul.f32.gmra.mxu0 %v1399
        %v1401 = vpop.f32.mrf.mxu0
        %v1402 = vadd.f32 %v1376, %v1401
        %1403 = vdwg.mxu0
        %1404 = vmatpush.msra.mxu0 0.0
        %1405 = vmatpush.msra.mxu0 0.0
        %1406 = vmatpush.msra.mxu0 0.0
        %1407 = vmatpush.msra.mxu0 0.0
        %1408 = vmatpush.msra.mxu0 0.0
        %1409 = vmatpush.msra.mxu0 0.0
        %1410 = vmatpush.msra.mxu0 0.0
        %1411 = vmatpush.msra.mxu0 0.0
        %1412 = vmatpush.msra.mxu0 0.0
        %1413 = vmatpush.msra.mxu0 0.0
        %1414 = vmatpush.msra.mxu0 0.0
        %1415 = vmatpush.msra.mxu0 0.0
        %1416 = vmatpush.msra.mxu0 0.0
        %1417 = vmatpush.msra.mxu0 0.0
        %1418 = vmatpush.msra.mxu0 0.0
        %v1419 = vand.u32 %v346, 4294901760
        %v1420 = vsub.f32 %v346, %v1419
        %1421 = vmatpush.msra.mxu0 %v1420
        %v1422 = vand.u32 %v1350, 4294901760
        %v1423 = vsub.f32 %v1350, %v1422
        %1424 = vmatmul.f32.gmra.mxu0 %v1423
        %v1425 = vpop.f32.mrf.mxu0
        %v1426 = vadd.f32 %v1402, %v1425
        %1427 = vdwg.mxu0
        %1428 = vmatpush.msra.mxu0 0.0
        %1429 = vmatpush.msra.mxu0 0.0
        %1430 = vmatpush.msra.mxu0 0.0
        %1431 = vmatpush.msra.mxu0 0.0
        %1432 = vmatpush.msra.mxu0 0.0
        %1433 = vmatpush.msra.mxu0 0.0
        %1434 = vmatpush.msra.mxu0 0.0
        %1435 = vmatpush.msra.mxu0 0.0
        %1436 = vmatpush.msra.mxu0 0.0
        %1437 = vmatpush.msra.mxu0 0.0
        %1438 = vmatpush.msra.mxu0 0.0
        %1439 = vmatpush.msra.mxu0 0.0
        %1440 = vmatpush.msra.mxu0 0.0
        %1441 = vmatpush.msra.mxu0 0.0
        %1442 = vmatpush.msra.mxu0 0.0
        %v1443 = vand.u32 %v346, 4294901760
        %1444 = vmatpush.msra.mxu0 %v1443
        %v1445 = vand.u32 %v1350, 4294901760
        %v1446 = vsub.f32 %v1350, %v1445
        %v1447 = vand.u32 %v1446, 4294901760
        %1448 = vmatmul.f32.gmra.mxu0 %v1447
        %v1449 = vpop.f32.mrf.mxu0
        %v1450 = vadd.f32 %v1426, %v1449
        %1451 = vdwg.mxu0
        %1452 = vmatpush.msra.mxu0 0.0
        %1453 = vmatpush.msra.mxu0 0.0
        %1454 = vmatpush.msra.mxu0 0.0
        %1455 = vmatpush.msra.mxu0 0.0
        %1456 = vmatpush.msra.mxu0 0.0
        %1457 = vmatpush.msra.mxu0 0.0
        %1458 = vmatpush.msra.mxu0 0.0
        %1459 = vmatpush.msra.mxu0 0.0
        %1460 = vmatpush.msra.mxu0 0.0
        %1461 = vmatpush.msra.mxu0 0.0
        %1462 = vmatpush.msra.mxu0 0.0
        %1463 = vmatpush.msra.mxu0 0.0
        %1464 = vmatpush.msra.mxu0 0.0
        %1465 = vmatpush.msra.mxu0 0.0
        %1466 = vmatpush.msra.mxu0 0.0
        %v1467 = vand.u32 %v346, 4294901760
        %v1468 = vsub.f32 %v346, %v1467
        %v1469 = vand.u32 %v1468, 4294901760
        %1470 = vmatpush.msra.mxu0 %v1469
        %v1471 = vand.u32 %v1350, 4294901760
        %1472 = vmatmul.f32.gmra.mxu0 %v1471
        %v1473 = vpop.f32.mrf.mxu0
        %v1474 = vadd.f32 %v1450, %v1473
        %1475 = vdwg.mxu0
        %1476 = vmatpush.msra.mxu0 0.0
        %1477 = vmatpush.msra.mxu0 0.0
        %1478 = vmatpush.msra.mxu0 0.0
        %1479 = vmatpush.msra.mxu0 0.0
        %1480 = vmatpush.msra.mxu0 0.0
        %1481 = vmatpush.msra.mxu0 0.0
        %1482 = vmatpush.msra.mxu0 0.0
        %1483 = vmatpush.msra.mxu0 0.0
        %1484 = vmatpush.msra.mxu0 0.0
        %1485 = vmatpush.msra.mxu0 0.0
        %1486 = vmatpush.msra.mxu0 0.0
        %1487 = vmatpush.msra.mxu0 0.0
        %1488 = vmatpush.msra.mxu0 0.0
        %1489 = vmatpush.msra.mxu0 0.0
        %1490 = vmatpush.msra.mxu0 0.0
        %v1491 = vand.u32 %v346, 4294901760
        %1492 = vmatpush.msra.mxu0 %v1491
        %v1493 = vand.u32 %v1350, 4294901760
        %1494 = vmatmul.f32.gmra.mxu0 %v1493
        %v1495 = vpop.f32.mrf.mxu0
        %v1496 = vadd.f32 %v1474, %v1495
        %1497 = vdwg.mxu0
        %v1499 = vsel %vm961, %v1021, 0
        %1501 = vmatpush.msra.mxu0 0.0
        %1502 = vmatpush.msra.mxu0 0.0
        %1503 = vmatpush.msra.mxu0 0.0
        %1504 = vmatpush.msra.mxu0 0.0
        %1505 = vmatpush.msra.mxu0 0.0
        %1506 = vmatpush.msra.mxu0 0.0
        %1507 = vmatpush.msra.mxu0 0.0
        %1508 = vmatpush.msra.mxu0 0.0
        %1509 = vmatpush.msra.mxu0 0.0
        %1510 = vmatpush.msra.mxu0 0.0
        %1511 = vmatpush.msra.mxu0 0.0
        %1512 = vmatpush.msra.mxu0 0.0
        %1513 = vmatpush.msra.mxu0 0.0
        %1514 = vmatpush.msra.mxu0 0.0
        %1515 = vmatpush.msra.mxu0 0.0
        %v1516 = vand.u32 %v347, 4294901760
        %1517 = vmatpush.msra.mxu0 %v1516
        %v1518 = vand.u32 %v1499, 4294901760
        %v1519 = vsub.f32 %v1499, %v1518
        %v1520 = vand.u32 %v1519, 4294901760
        %v1521 = vsub.f32 %v1519, %v1520
        %v1522 = vand.u32 %v1521, 4294901760
        %1523 = vmatmul.f32.gmra.mxu0 %v1522
        %v1524 = vpop.f32.mrf.mxu0
        %v1525 = vadd.f32 0.0, %v1524
        %1526 = vdwg.mxu0
        %1527 = vmatpush.msra.mxu0 0.0
        %1528 = vmatpush.msra.mxu0 0.0
        %1529 = vmatpush.msra.mxu0 0.0
        %1530 = vmatpush.msra.mxu0 0.0
        %1531 = vmatpush.msra.mxu0 0.0
        %1532 = vmatpush.msra.mxu0 0.0
        %1533 = vmatpush.msra.mxu0 0.0
        %1534 = vmatpush.msra.mxu0 0.0
        %1535 = vmatpush.msra.mxu0 0.0
        %1536 = vmatpush.msra.mxu0 0.0
        %1537 = vmatpush.msra.mxu0 0.0
        %1538 = vmatpush.msra.mxu0 0.0
        %1539 = vmatpush.msra.mxu0 0.0
        %1540 = vmatpush.msra.mxu0 0.0
        %1541 = vmatpush.msra.mxu0 0.0
        %v1542 = vand.u32 %v347, 4294901760
        %v1543 = vsub.f32 %v347, %v1542
        %v1544 = vand.u32 %v1543, 4294901760
        %v1545 = vsub.f32 %v1543, %v1544
        %v1546 = vand.u32 %v1545, 4294901760
        %1547 = vmatpush.msra.mxu0 %v1546
        %v1548 = vand.u32 %v1499, 4294901760
        %1549 = vmatmul.f32.gmra.mxu0 %v1548
        %v1550 = vpop.f32.mrf.mxu0
        %v1551 = vadd.f32 %v1525, %v1550
        %1552 = vdwg.mxu0
        %1553 = vmatpush.msra.mxu0 0.0
        %1554 = vmatpush.msra.mxu0 0.0
        %1555 = vmatpush.msra.mxu0 0.0
        %1556 = vmatpush.msra.mxu0 0.0
        %1557 = vmatpush.msra.mxu0 0.0
        %1558 = vmatpush.msra.mxu0 0.0
        %1559 = vmatpush.msra.mxu0 0.0
        %1560 = vmatpush.msra.mxu0 0.0
        %1561 = vmatpush.msra.mxu0 0.0
        %1562 = vmatpush.msra.mxu0 0.0
        %1563 = vmatpush.msra.mxu0 0.0
        %1564 = vmatpush.msra.mxu0 0.0
        %1565 = vmatpush.msra.mxu0 0.0
        %1566 = vmatpush.msra.mxu0 0.0
        %1567 = vmatpush.msra.mxu0 0.0
        %v1568 = vand.u32 %v347, 4294901760
        %v1569 = vsub.f32 %v347, %v1568
        %1570 = vmatpush.msra.mxu0 %v1569
        %v1571 = vand.u32 %v1499, 4294901760
        %v1572 = vsub.f32 %v1499, %v1571
        %1573 = vmatmul.f32.gmra.mxu0 %v1572
        %v1574 = vpop.f32.mrf.mxu0
        %v1575 = vadd.f32 %v1551, %v1574
        %1576 = vdwg.mxu0
        %1577 = vmatpush.msra.mxu0 0.0
        %1578 = vmatpush.msra.mxu0 0.0
        %1579 = vmatpush.msra.mxu0 0.0
        %1580 = vmatpush.msra.mxu0 0.0
        %1581 = vmatpush.msra.mxu0 0.0
        %1582 = vmatpush.msra.mxu0 0.0
        %1583 = vmatpush.msra.mxu0 0.0
        %1584 = vmatpush.msra.mxu0 0.0
        %1585 = vmatpush.msra.mxu0 0.0
        %1586 = vmatpush.msra.mxu0 0.0
        %1587 = vmatpush.msra.mxu0 0.0
        %1588 = vmatpush.msra.mxu0 0.0
        %1589 = vmatpush.msra.mxu0 0.0
        %1590 = vmatpush.msra.mxu0 0.0
        %1591 = vmatpush.msra.mxu0 0.0
        %v1592 = vand.u32 %v347, 4294901760
        %1593 = vmatpush.msra.mxu0 %v1592
        %v1594 = vand.u32 %v1499, 4294901760
        %v1595 = vsub.f32 %v1499, %v1594
        %v1596 = vand.u32 %v1595, 4294901760
        %1597 = vmatmul.f32.gmra.mxu0 %v1596
        %v1598 = vpop.f32.mrf.mxu0
        %v1599 = vadd.f32 %v1575, %v1598
        %1600 = vdwg.mxu0
        %1601 = vmatpush.msra.mxu0 0.0
        %1602 = vmatpush.msra.mxu0 0.0
        %1603 = vmatpush.msra.mxu0 0.0
        %1604 = vmatpush.msra.mxu0 0.0
        %1605 = vmatpush.msra.mxu0 0.0
        %1606 = vmatpush.msra.mxu0 0.0
        %1607 = vmatpush.msra.mxu0 0.0
        %1608 = vmatpush.msra.mxu0 0.0
        %1609 = vmatpush.msra.mxu0 0.0
        %1610 = vmatpush.msra.mxu0 0.0
        %1611 = vmatpush.msra.mxu0 0.0
        %1612 = vmatpush.msra.mxu0 0.0
        %1613 = vmatpush.msra.mxu0 0.0
        %1614 = vmatpush.msra.mxu0 0.0
        %1615 = vmatpush.msra.mxu0 0.0
        %v1616 = vand.u32 %v347, 4294901760
        %v1617 = vsub.f32 %v347, %v1616
        %v1618 = vand.u32 %v1617, 4294901760
        %1619 = vmatpush.msra.mxu0 %v1618
        %v1620 = vand.u32 %v1499, 4294901760
        %1621 = vmatmul.f32.gmra.mxu0 %v1620
        %v1622 = vpop.f32.mrf.mxu0
        %v1623 = vadd.f32 %v1599, %v1622
        %1624 = vdwg.mxu0
        %1625 = vmatpush.msra.mxu0 0.0
        %1626 = vmatpush.msra.mxu0 0.0
        %1627 = vmatpush.msra.mxu0 0.0
        %1628 = vmatpush.msra.mxu0 0.0
        %1629 = vmatpush.msra.mxu0 0.0
        %1630 = vmatpush.msra.mxu0 0.0
        %1631 = vmatpush.msra.mxu0 0.0
        %1632 = vmatpush.msra.mxu0 0.0
        %1633 = vmatpush.msra.mxu0 0.0
        %1634 = vmatpush.msra.mxu0 0.0
        %1635 = vmatpush.msra.mxu0 0.0
        %1636 = vmatpush.msra.mxu0 0.0
        %1637 = vmatpush.msra.mxu0 0.0
        %1638 = vmatpush.msra.mxu0 0.0
        %1639 = vmatpush.msra.mxu0 0.0
        %v1640 = vand.u32 %v347, 4294901760
        %1641 = vmatpush.msra.mxu0 %v1640
        %v1642 = vand.u32 %v1499, 4294901760
        %1643 = vmatmul.f32.gmra.mxu0 %v1642
        %v1644 = vpop.f32.mrf.mxu0
        %v1645 = vadd.f32 %v1623, %v1644
        %1646 = vdwg.mxu0
        %v1647 = vld [vmem:[#allocation5] sm:$0xff]
        %v1648 = vld [vmem:[#allocation5 + $0x8] sm:$0xff]
        %v1649 = vld [vmem:[#allocation5 + $0x10] sm:$0xff]
        %v1650 = vld [vmem:[#allocation5 + $0x18] sm:$0xff]
        %1652 = vset.pattern.permute.xlu0 0
        %1653 = vperm.xlu0 %1652, %v983
        %v1654 = vpop.permute.xlu0 %1653
        %1657 = vset.pattern.permute.xlu0 0
        %1658 = vperm.xlu0 %1657, %v985
        %v1659 = vpop.permute.xlu0 %1658
        %1662 = vset.pattern.permute.xlu0 0
        %1663 = vperm.xlu0 %1662, %v987
        %v1664 = vpop.permute.xlu0 %1663
        %1667 = vset.pattern.permute.xlu0 0
        %1668 = vperm.xlu0 %1667, %v989
        %v1669 = vpop.permute.xlu0 %1668
        %v1671 = vmul.f32 %v1654, %v1647
        %v1672 = vmul.f32 %v1659, %v1648
        %v1673 = vmul.f32 %v1664, %v1649
        %v1674 = vmul.f32 %v1669, %v1650
        %v1675 = vadd.f32 %v1671, %v1198
        %v1676 = vadd.f32 %v1672, %v1347
        %v1677 = vadd.f32 %v1673, %v1496
        %v1678 = vadd.f32 %v1674, %v1645
        %1679 = vst.msk [vmem:[#allocation5] sm:$0xff] %vm348, %v1675
        %1680 = vst.msk [vmem:[#allocation5 + $0x8] sm:$0xff] %vm348, %v1676
        %1681 = vst.msk [vmem:[#allocation5 + $0x10] sm:$0xff] %vm348, %v1677
        %1682 = vst.msk [vmem:[#allocation5 + $0x18] sm:$0xff] %vm348, %v1678
        %1683 = vst.msk [vmem:[#allocation3] sm:$0xff] %vm1046, %v974
        %1684 = vst.msk [vmem:[#allocation3 + $0x8] sm:$0xff] %vm1046, %v975
        %1685 = vst.msk [vmem:[#allocation3 + $0x10] sm:$0xff] %vm1046, %v976
        %1686 = vst.msk [vmem:[#allocation3 + $0x18] sm:$0xff] %vm1046, %v977
        // Predicated region
        $region49: #{tpu_custom_call.1} parent=31 // pred_check
          %p1687 = pneg %p306
        $region50: #{tpu_custom_call.1} parent=31 // pred_check_branch
          %1689 = sbr.rel (%p1687) target = $region52
        $region51: #{tpu_custom_call.1} parent=31 // pred_region
          %v1690 = vld [vmem:[#allocation5] sm:$0xff]
          %v1691 = vld [vmem:[#allocation5 + $0x8] sm:$0xff]
          %v1692 = vld [vmem:[#allocation5 + $0x10] sm:$0xff]
          %v1693 = vld [vmem:[#allocation5 + $0x18] sm:$0xff]
          %v1694 = vld [vmem:[#allocation4] sm:$0xff]
          %v1695 = vld [vmem:[#allocation4 + $0x8] sm:$0xff]
          %v1696 = vld [vmem:[#allocation4 + $0x10] sm:$0xff]
          %v1697 = vld [vmem:[#allocation4 + $0x18] sm:$0xff]
          %1699 = vset.pattern.permute.xlu0 0
          %1700 = vperm.xlu0 %1699, %v1694
          %v1701 = vpop.permute.xlu0 %1700
          %1704 = vset.pattern.permute.xlu0 0
          %1705 = vperm.xlu0 %1704, %v1695
          %v1706 = vpop.permute.xlu0 %1705
          %1709 = vset.pattern.permute.xlu0 0
          %1710 = vperm.xlu0 %1709, %v1696
          %v1711 = vpop.permute.xlu0 %1710
          %1714 = vset.pattern.permute.xlu0 0
          %1715 = vperm.xlu0 %1714, %v1697
          %v1716 = vpop.permute.xlu0 %1715
          %v1718 = vrcp.pop %v1701
          %v1719 = vmul.f32 %v1701, %v1718
          %v1720 = vsub.f32 1.0, %v1719
          %v1721 = vmul.f32 %v1718, %v1720
          %v1722 = vadd.f32 %v1718, %v1721
          %vm1723 = vweird.f32 %v1701
          %vm1724 = vweird.f32 %v1718
          %vm1725 = vmor %vm1723, %vm1724
          %v1726 = vsel %vm1725, %v1718, %v1722
          %v1727 = vand.u32 2147483647, %v1701
          %vm1728 = vcmp.eq.f32.partialorder %v1727, 8.507059e+37
          %v1729 = vand.u32 %v1701, 2147483648
          %v1730 = vor.u32 1.1754944e-38, %v1729
          %v1731 = vsel %vm1728, %v1730, %v1726
          %v1732 = vmul.f32 %v1690, %v1731
          %v1733 = vrcp.pop %v1706
          %v1734 = vmul.f32 %v1706, %v1733
          %v1735 = vsub.f32 1.0, %v1734
          %v1736 = vmul.f32 %v1733, %v1735
          %v1737 = vadd.f32 %v1733, %v1736
          %vm1738 = vweird.f32 %v1706
          %vm1739 = vweird.f32 %v1733
          %vm1740 = vmor %vm1738, %vm1739
          %v1741 = vsel %vm1740, %v1733, %v1737
          %v1742 = vand.u32 2147483647, %v1706
          %vm1743 = vcmp.eq.f32.partialorder %v1742, 8.507059e+37
          %v1744 = vand.u32 %v1706, 2147483648
          %v1745 = vor.u32 1.1754944e-38, %v1744
          %v1746 = vsel %vm1743, %v1745, %v1741
          %v1747 = vmul.f32 %v1691, %v1746
          %v1748 = vrcp.pop %v1711
          %v1749 = vmul.f32 %v1711, %v1748
          %v1750 = vsub.f32 1.0, %v1749
          %v1751 = vmul.f32 %v1748, %v1750
          %v1752 = vadd.f32 %v1748, %v1751
          %vm1753 = vweird.f32 %v1711
          %vm1754 = vweird.f32 %v1748
          %vm1755 = vmor %vm1753, %vm1754
          %v1756 = vsel %vm1755, %v1748, %v1752
          %v1757 = vand.u32 2147483647, %v1711
          %vm1758 = vcmp.eq.f32.partialorder %v1757, 8.507059e+37
          %v1759 = vand.u32 %v1711, 2147483648
          %v1760 = vor.u32 1.1754944e-38, %v1759
          %v1761 = vsel %vm1758, %v1760, %v1756
          %v1762 = vmul.f32 %v1692, %v1761
          %v1763 = vrcp.pop %v1716
          %v1764 = vmul.f32 %v1716, %v1763
          %v1765 = vsub.f32 1.0, %v1764
          %v1766 = vmul.f32 %v1763, %v1765
          %v1767 = vadd.f32 %v1763, %v1766
          %vm1768 = vweird.f32 %v1716
          %vm1769 = vweird.f32 %v1763
          %vm1770 = vmor %vm1768, %vm1769
          %v1771 = vsel %vm1770, %v1763, %v1767
          %v1772 = vand.u32 2147483647, %v1716
          %vm1773 = vcmp.eq.f32.partialorder %v1772, 8.507059e+37
          %v1774 = vand.u32 %v1716, 2147483648
          %v1775 = vor.u32 1.1754944e-38, %v1774
          %v1776 = vsel %vm1773, %v1775, %v1771
          %v1777 = vmul.f32 %v1693, %v1776
          %1778 = vst.msk [vmem:[%s301] sm:$0xff] %vm348, %v1732
          %1779 = vst.msk [vmem:[%s301 + $0x8] sm:$0xff] %vm348, %v1747
          %1780 = vst.msk [vmem:[%s301 + $0x10] sm:$0xff] %vm348, %v1762
          %1781 = vst.msk [vmem:[%s301 + $0x18] sm:$0xff] %vm348, %v1777
        $region52: #{tpu_custom_call.1} parent=31 // pred_fallthru
          _
        %s1782 = sand.u32 %s136, 1
        %s1783 = scalar_lea.sflag [#allocation8], %s1782
        %s1784 = sand.u32 %s136, 1
        %s1785 = smul.addr %s1784, 32
        %s1786 = scalar_lea.vmem [#allocation12], %s1785
        // Predicated region
        $region53: #{tpu_custom_call.1} parent=31 // pred_check
          %p1787 = pneg %p146
        $region54: #{tpu_custom_call.1} parent=31 // pred_check_branch
          %1789 = sbr.rel (%p1787) target = $region56
        $region55: #{tpu_custom_call.1} parent=31 // pred_region
          %s1790 = smul.u32 4, %s28
          %1792 = vsyncadd %s1783, 0
          %s1793 = sadd.s32 %s29, %s1790
          %s1794 = smul.addr %s1793, 8
          %s1795 = scalar_lea.hbm %s3, %s1794
          %s1796 = sshll.u32 %s1786, 4
          %s1797 = int_to_ptr.vmem [resolvable:$true] %s1796
          %s1798 = sshll.u32 %s1795, 4
          %s1799 = int_to_ptr.hbm [resolvable:$true] %s1798
          %1804 = dma.vmem_to_hbm [thread:$0]  %s1797, 512, %s1799, %s1783, 128, 128, 8
        $region56: #{tpu_custom_call.1} parent=31 // pred_fallthru
          _
      $region32: #{tpu_custom_call.1} parent=5 // pred_fallthru
        _
      %p1805 = scmp.le.s32.totalorder 2, %s18
      // Predicated region
      $region57: #{tpu_custom_call.1} parent=5 // pred_check
        %p1806 = pneg %p1805
      $region58: #{tpu_custom_call.1} parent=5 // pred_check_branch
        %1808 = sbr.rel (%p1806) target = $region60
      $region59: #{tpu_custom_call.1} parent=5 // pred_region
        %s1809 = ssub.s32 %s18, 2
        // Predicated region
        $region61: #{tpu_custom_call.1} parent=59 // pred_check
          %p1810 = pneg %p152
        $region62: #{tpu_custom_call.1} parent=59 // pred_check_branch
          %1812 = sbr.rel (%p1810) target = $region64
        $region63: #{tpu_custom_call.1} parent=59 // pred_region
          %s1813 = sand.u32 %s137, 1
          %s1814 = scalar_lea.sflag [#allocation8], %s1813
          %s1815 = sand.u32 %s137, 1
          %s1816 = smul.addr %s1815, 32
          %s1817 = scalar_lea.vmem [#allocation12], %s1816
          %1819 = dma.done %s1814, 512
        $region64: #{tpu_custom_call.1} parent=59 // pred_fallthru
          _
      $region60: #{tpu_custom_call.1} parent=5 // pred_fallthru
        _
    $region6: #{tpu_custom_call.1} parent=1 // loop_footer
      %s22 = sadd.s32 1, %s18
    $region7: #{tpu_custom_call.1} parent=1 // loop_footer_branch
      %17 = sbr.rel target = $region3
    $region8: #{tpu_custom_call.1} parent=1 // loop_exit
      _
    %1820 = vsyncpa [#allocation7], 1
    %s1821 = scalar_lea.sflag [#allocation7], 1
    %1822 = vsyncpa %s1821, 1
    %1823 = vsyncpa [#allocation10], 1
    %s1824 = scalar_lea.sflag [#allocation10], 1
    %1825 = vsyncpa %s1824, 1
    %1826 = vsyncpa [#allocation8], 1
    %s1827 = scalar_lea.sflag [#allocation8], 1
    %1828 = vsyncpa %s1827, 1

// kernel: tpu_custom_call.1
$region0: #{tpu_custom_call.1}
  #allocation0 [shape = 'u32[]', space=smem, size = 0x4, offset = 0x4, fixed_abs, tag = 'smem constant byte address 0x4 - core index']
  #allocation1 [shape = 'u32[72,128]{1,0:T(1,128)}', space=vmem, size = 0x9000, scoped, tag = 'internal scratch']
  #allocation2 [shape = 'f32[4,8,32]{2,1,0:T(8,128)}', space=vmem, size = 0x4000, scoped, tag = 'scratch operand']
  #allocation3 [shape = 'f32[4,8,1]{2,1,0:T(8,128)}', space=vmem, size = 0x4000, scoped, tag = 'scratch operand']
  #allocation4 [shape = 'f32[4,8,1]{2,1,0:T(8,128)}', space=vmem, size = 0x4000, scoped, tag = 'scratch operand']
  #allocation5 [shape = 'f32[4,8,32]{2,1,0:T(8,128)}', space=vmem, size = 0x4000, scoped, tag = 'scratch operand']
  %s0 = inlined_call_operand.hbm [shape: f32[8,8,32], index: 0, kind: input, shape index: {}]
  %s1 = inlined_call_operand.hbm [shape: f32[8,8,32], index: 1, kind: input, shape index: {}]
  %s2 = inlined_call_operand.hbm [shape: f32[8,8,32], index: 2, kind: input, shape index: {}]
  %s3 = inlined_call_operand.hbm [shape: f32[8,8,32], index: 3, kind: output, shape index: {}]
  %s4 = sld [smem:[#allocation0]]
  $region65: #{tpu_custom_call.1} parent=0
    _
  %s6 = ssub.s32 1, %s4
  %s7 = scalar_select 0, %s6, %s4
  $region1: #{tpu_custom_call.1} parent=0
    #allocation6 [shape = 'u8[32768]{0}', space=vmem, size = 0x8000, scoped, tag = 'input window, operand 0']
    #allocation7 [shape = 's32[2]{0}', space=sflag, size = 0x8, scoped, tag = 'scoped memory for tpu_custom_call.1']
    #allocation8 [shape = 's32[2]{0}', space=sflag, size = 0x8, scoped, tag = 'scoped memory for tpu_custom_call.1']
    #allocation9 [shape = 'u8[32768]{0}', space=vmem, size = 0x8000, scoped, tag = 'input window, operand 1']
    #allocation10 [shape = 's32[2]{0}', space=sflag, size = 0x8, scoped, tag = 'scoped memory for tpu_custom_call.1']
    #allocation11 [shape = 'u8[32768]{0}', space=vmem, size = 0x8000, scoped, tag = 'input window, operand 2']
    #allocation12 [shape = 'u8[32768]{0}', space=vmem, size = 0x8000, scoped, tag = 'output window, operand 0']
    %8 = vsyncpa [#allocation7], 0
    %s9 = scalar_lea.sflag [#allocation7], 1
    %10 = vsyncpa %s9, 0
    %11 = vsyncpa [#allocation10], 0
    %s12 = scalar_lea.sflag [#allocation10], 1
    %13 = vsyncpa %s12, 0
    %14 = vsyncpa [#allocation8], 0
    %s15 = scalar_lea.sflag [#allocation8], 1
    %16 = vsyncpa %s15, 0
    loop: start=0, step=1, limit=4
    $region2: #{tpu_custom_call.1} parent=1 // loop_pre_header
      _
    $region3: #{tpu_custom_call.1} parent=1 // loop_header
      %s18 = sphi 0, %s22
      %p19 = scmp.ge.s32.totalorder %s18, 4
      %s25 = sphi 0, %s44
      %s26 = sphi 0, %s40
      %s27 = sphi 0, %s36
      %s28 = sphi 0, %s25
      %s29 = sphi 0, %s26
      %s30 = sphi 0, %s27
      %s31 = sphi 0, %s28
      %s32 = sphi 0, %s29
      %s33 = sphi 0, %s30
      %s49 = sphi 0, %s51
      %s52 = sphi 0, %s49
      %s53 = sphi 0, %s52
      %s69 = sphi 0, %s53
      %s77 = sphi 0, %s79
      %s80 = sphi 0, %s77
      %s81 = sphi 0, %s80
      %s97 = sphi 0, %s81
      %s105 = sphi 0, %s107
      %s108 = sphi 0, %s105
      %s109 = sphi 0, %s108
      %s125 = sphi 0, %s109
      %s133 = sphi 0, %s135
      %s136 = sphi 0, %s133
      %s137 = sphi 0, %s136
      %s153 = sphi 0, %s137
    $region4: #{tpu_custom_call.1} parent=1 // loop_header_branch
      %21 = sbr.rel (%p19) target = $region8
    $region5: #{tpu_custom_call.1} parent=1 // loop_body
      %s23 = ssub.s32 %s18, 1
      %s24 = ssub.s32 %s18, 2
      %s34 = sadd.s32 1, %s27
      %p35 = scmp.ge.s32.totalorder %s34, 1
      %s36 = scalar_select %p35, 0, %s34
      %s37 = sadd.s32 1, %s26
      %s38 = scalar_select %p35, %s37, %s26
      %p39 = scmp.ge.s32.totalorder %s38, 1
      %s40 = scalar_select %p39, 0, %s38
      %s41 = sadd.s32 1, %s25
      %s42 = scalar_select %p39, %s41, %s25
      %p43 = scmp.ge.s32.totalorder %s42, 2
      %s44 = scalar_select %p43, 0, %s42
      %s45 = ssub.s32 %s25, %s44
      %s46 = ssub.s32 %s26, %s40
      %s47 = sor.u32 %s45, %s46
      %p48 = scmp.eq.s32.totalorder %s47, 0
      %s50 = sadd.s32 %s49, 1
      %s51 = scalar_select %p48, %s49, %s50
      %p54 = pneg %p48
      %p55 = scmp.eq.s32.totalorder %s18, 1
      %p56 = por %p54, %p55
      %p57 = scmp.ne.s32.totalorder %s49, %s52
      %p58 = scmp.eq.s32.totalorder %s18, 0
      %p59 = por %p57, %p58
      %p60 = scmp.ne.s32.totalorder %s49, %s52
      %p61 = scmp.eq.s32.totalorder %s23, 1
      %p62 = por %p60, %p61
      %p63 = scmp.ne.s32.totalorder %s52, %s53
      %p64 = scmp.eq.s32.totalorder %s23, 0
      %p65 = por %p63, %p64
      %p66 = scmp.ne.s32.totalorder %s52, %s53
      %p67 = scmp.eq.s32.totalorder %s24, 1
      %p68 = por %p66, %p67
      %p70 = scmp.ne.s32.totalorder %s53, %s69
      %p71 = scmp.eq.s32.totalorder %s24, 0
      %p72 = por %p70, %p71
      %s73 = ssub.s32 %s25, %s44
      %s74 = ssub.s32 %s27, %s36
      %s75 = sor.u32 %s73, %s74
      %p76 = scmp.eq.s32.totalorder %s75, 0
      %s78 = sadd.s32 %s77, 1
      %s79 = scalar_select %p76, %s77, %s78
      %p82 = pneg %p76
      %p83 = scmp.eq.s32.totalorder %s18, 1
      %p84 = por %p82, %p83
      %p85 = scmp.ne.s32.totalorder %s77, %s80
      %p86 = scmp.eq.s32.totalorder %s18, 0
      %p87 = por %p85, %p86
      %p88 = scmp.ne.s32.totalorder %s77, %s80
      %p89 = scmp.eq.s32.totalorder %s23, 1
      %p90 = por %p88, %p89
      %p91 = scmp.ne.s32.totalorder %s80, %s81
      %p92 = scmp.eq.s32.totalorder %s23, 0
      %p93 = por %p91, %p92
      %p94 = scmp.ne.s32.totalorder %s80, %s81
      %p95 = scmp.eq.s32.totalorder %s24, 1
      %p96 = por %p94, %p95
      %p98 = scmp.ne.s32.totalorder %s81, %s97
      %p99 = scmp.eq.s32.totalorder %s24, 0
      %p100 = por %p98, %p99
      %s101 = ssub.s32 %s25, %s44
      %s102 = ssub.s32 %s27, %s36
      %s103 = sor.u32 %s101, %s102
      %p104 = scmp.eq.s32.totalorder %s103, 0
      %s106 = sadd.s32 %s105, 1
      %s107 = scalar_select %p104, %s105, %s106
      %p110 = pneg %p104
      %p111 = scmp.eq.s32.totalorder %s18, 1
      %p112 = por %p110, %p111
      %p113 = scmp.ne.s32.totalorder %s105, %s108
      %p114 = scmp.eq.s32.totalorder %s18, 0
      %p115 = por %p113, %p114
      %p116 = scmp.ne.s32.totalorder %s105, %s108
      %p117 = scmp.eq.s32.totalorder %s23, 1
      %p118 = por %p116, %p117
      %p119 = scmp.ne.s32.totalorder %s108, %s109
      %p120 = scmp.eq.s32.totalorder %s23, 0
      %p121 = por %p119, %p120
      %p122 = scmp.ne.s32.totalorder %s108, %s109
      %p123 = scmp.eq.s32.totalorder %s24, 1
      %p124 = por %p122, %p123
      %p126 = scmp.ne.s32.totalorder %s109, %s125
      %p127 = scmp.eq.s32.totalorder %s24, 0
      %p128 = por %p126, %p127
      %s129 = ssub.s32 %s25, %s44
      %s130 = ssub.s32 %s26, %s40
      %s131 = sor.u32 %s129, %s130
      %p132 = scmp.eq.s32.totalorder %s131, 0
      %s134 = sadd.s32 %s133, 1
      %s135 = scalar_select %p132, %s133, %s134
      %p138 = pneg %p132
      %p139 = scmp.eq.s32.totalorder %s18, 1
      %p140 = por %p138, %p139
      %p141 = scmp.ne.s32.totalorder %s133, %s136
      %p142 = scmp.eq.s32.totalorder %s18, 0
      %p143 = por %p141, %p142
      %p144 = scmp.ne.s32.totalorder %s133, %s136
      %p145 = scmp.eq.s32.totalorder %s23, 1
      %p146 = por %p144, %p145
      %p147 = scmp.ne.s32.totalorder %s136, %s137
      %p148 = scmp.eq.s32.totalorder %s23, 0
      %p149 = por %p147, %p148
      %p150 = scmp.ne.s32.totalorder %s136, %s137
      %p151 = scmp.eq.s32.totalorder %s24, 1
      %p152 = por %p150, %p151
      %p154 = scmp.ne.s32.totalorder %s137, %s153
      %p155 = scmp.eq.s32.totalorder %s24, 0
      %p156 = por %p154, %p155
      %p157 = scmp.le.s32.totalorder 1, %s18
      %p158 = scmp.lt.s32.totalorder %s18, 3
      %p159 = pnand %p157, %p158
      %p160 = pneg %p159
      // Predicated region
      $region9: #{tpu_custom_call.1} parent=5 // pred_check
        _
      $region10: #{tpu_custom_call.1} parent=5 // pred_check_branch
        %162 = sbr.rel (%p159) target = $region12
      $region11: #{tpu_custom_call.1} parent=5 // pred_region
        %s163 = ssub.s32 %s18, 1
      $region12: #{tpu_custom_call.1} parent=5 // pred_fallthru
        _
      %p164 = scmp.lt.s32.totalorder %s18, 2
      // Predicated region
      $region13: #{tpu_custom_call.1} parent=5 // pred_check
        %p165 = pneg %p164
      $region14: #{tpu_custom_call.1} parent=5 // pred_check_branch
        %167 = sbr.rel (%p165) target = $region16
      $region15: #{tpu_custom_call.1} parent=5 // pred_region
        // Predicated region
        $region17: #{tpu_custom_call.1} parent=15 // pred_check
          %p168 = pneg %p59
        $region18: #{tpu_custom_call.1} parent=15 // pred_check_branch
          %170 = sbr.rel (%p168) target = $region20
        $region19: #{tpu_custom_call.1} parent=15 // pred_region
          %s171 = sand.u32 %s49, 1
          %s172 = scalar_lea.sflag [#allocation7], %s171
          %s173 = sand.u32 %s49, 1
          %s174 = smul.addr %s173, 32
          %s175 = scalar_lea.vmem [#allocation6], %s174
          %s176 = smul.u32 4, %s25
          %178 = vsyncadd %s172, 0
          %s179 = sadd.s32 %s26, %s176
          %s180 = smul.addr %s179, 8
          %s181 = scalar_lea.hbm %s0, %s180
          %s182 = sshll.u32 %s181, 4
          %s183 = int_to_ptr.hbm [resolvable:$true] %s182
          %s184 = sshll.u32 %s175, 4
          %s185 = int_to_ptr.vmem [resolvable:$true] %s184
          %190 = dma.hbm_to_vmem [thread:$0]  %s183, 512, %s185, %s172, 128, 128, 8
        $region20: #{tpu_custom_call.1} parent=15 // pred_fallthru
          _
        // Predicated region
        $region21: #{tpu_custom_call.1} parent=15 // pred_check
          %p191 = pneg %p87
        $region22: #{tpu_custom_call.1} parent=15 // pred_check_branch
          %193 = sbr.rel (%p191) target = $region24
        $region23: #{tpu_custom_call.1} parent=15 // pred_region
          %s194 = sand.u32 %s18, 1
          %s195 = scalar_lea.sflag [#allocation10], %s194
          %s196 = sand.u32 %s77, 1
          %s197 = smul.addr %s196, 32
          %s198 = scalar_lea.vmem [#allocation9], %s197
          %s199 = smul.u32 4, %s25
          %201 = vsyncadd %s195, 0
          %s202 = sadd.s32 %s27, %s199
          %s203 = smul.addr %s202, 8
          %s204 = scalar_lea.hbm %s1, %s203
          %s205 = sshll.u32 %s204, 4
          %s206 = int_to_ptr.hbm [resolvable:$true] %s205
          %s207 = sshll.u32 %s198, 4
          %s208 = int_to_ptr.vmem [resolvable:$true] %s207
          %213 = dma.hbm_to_vmem [thread:$0]  %s206, 512, %s208, %s195, 128, 128, 8
        $region24: #{tpu_custom_call.1} parent=15 // pred_fallthru
          _
        // Predicated region
        $region25: #{tpu_custom_call.1} parent=15 // pred_check
          %p214 = pneg %p115
        $region26: #{tpu_custom_call.1} parent=15 // pred_check_branch
          %216 = sbr.rel (%p214) target = $region28
        $region27: #{tpu_custom_call.1} parent=15 // pred_region
          %s217 = sand.u32 %s18, 1
          %s218 = scalar_lea.sflag [#allocation10], %s217
          %s219 = sand.u32 %s105, 1
          %s220 = smul.addr %s219, 32
          %s221 = scalar_lea.vmem [#allocation11], %s220
          %s222 = smul.u32 4, %s25
          %224 = vsyncadd %s218, 0
          %s225 = sadd.s32 %s27, %s222
          %s226 = smul.addr %s225, 8
          %s227 = scalar_lea.hbm %s2, %s226
          %s228 = sshll.u32 %s227, 4
          %s229 = int_to_ptr.hbm [resolvable:$true] %s228
          %s230 = sshll.u32 %s221, 4
          %s231 = int_to_ptr.vmem [resolvable:$true] %s230
          %236 = dma.hbm_to_vmem [thread:$0]  %s229, 512, %s231, %s218, 128, 128, 8
        $region28: #{tpu_custom_call.1} parent=15 // pred_fallthru
          _
      $region16: #{tpu_custom_call.1} parent=5 // pred_fallthru
        _
      %p237 = scmp.le.s32.totalorder 1, %s18
      %p238 = scmp.lt.s32.totalorder %s18, 3
      %p239 = pnand %p237, %p238
      %p240 = pneg %p239
      // Predicated region
      $region29: #{tpu_custom_call.1} parent=5 // pred_check
        _
      $region30: #{tpu_custom_call.1} parent=5 // pred_check_branch
        %242 = sbr.rel (%p239) target = $region32
      $region31: #{tpu_custom_call.1} parent=5 // pred_region
        %s243 = ssub.s32 %s18, 1
        %s244 = sand.u32 %s52, 1
        %s245 = scalar_lea.sflag [#allocation7], %s244
        %s246 = sand.u32 %s52, 1
        %s247 = smul.addr %s246, 32
        %s248 = scalar_lea.vmem [#allocation6], %s247
        // Predicated region
        $region33: #{tpu_custom_call.1} parent=31 // pred_check
          %p249 = pneg %p65
        $region34: #{tpu_custom_call.1} parent=31 // pred_check_branch
          %251 = sbr.rel (%p249) target = $region36
        $region35: #{tpu_custom_call.1} parent=31 // pred_region
          %253 = dma.done %s245, 512
        $region36: #{tpu_custom_call.1} parent=31 // pred_fallthru
          _
        %s254 = sand.u32 %s23, 1
        %s255 = scalar_lea.sflag [#allocation10], %s254
        %s256 = sand.u32 %s80, 1
        %s257 = smul.addr %s256, 32
        %s258 = scalar_lea.vmem [#allocation9], %s257
        // Predicated region
        $region37: #{tpu_custom_call.1} parent=31 // pred_check
          %p259 = pneg %p93
        $region38: #{tpu_custom_call.1} parent=31 // pred_check_branch
          %261 = sbr.rel (%p259) target = $region40
        $region39: #{tpu_custom_call.1} parent=31 // pred_region
          %263 = dma.done %s255, 512
        $region40: #{tpu_custom_call.1} parent=31 // pred_fallthru
          _
        %s264 = sand.u32 %s23, 1
        %s265 = scalar_lea.sflag [#allocation10], %s264
        %s266 = sand.u32 %s108, 1
        %s267 = smul.addr %s266, 32
        %s268 = scalar_lea.vmem [#allocation11], %s267
        // Predicated region
        $region41: #{tpu_custom_call.1} parent=31 // pred_check
          %p269 = pneg %p121
        $region42: #{tpu_custom_call.1} parent=31 // pred_check_branch
          %271 = sbr.rel (%p269) target = $region44
        $region43: #{tpu_custom_call.1} parent=31 // pred_region
          %273 = dma.done %s265, 512
        $region44: #{tpu_custom_call.1} parent=31 // pred_fallthru
          _
        %s274 = sand.u32 %s52, 1
        %s275 = scalar_lea.sflag [#allocation7], %s274
        %s276 = sand.u32 %s52, 1
        %s277 = smul.addr %s276, 32
        %s278 = scalar_lea.vmem [#allocation6], %s277
        %p279 = pneg %p65
        %p280 = pneg %p62
        %s281 = sand.u32 %s23, 1
        %s282 = scalar_lea.sflag [#allocation10], %s281
        %s283 = sand.u32 %s80, 1
        %s284 = smul.addr %s283, 32
        %s285 = scalar_lea.vmem [#allocation9], %s284
        %p286 = pneg %p93
        %p287 = pneg %p90
        %s288 = sand.u32 %s23, 1
        %s289 = scalar_lea.sflag [#allocation10], %s288
        %s290 = sand.u32 %s108, 1
        %s291 = smul.addr %s290, 32
        %s292 = scalar_lea.vmem [#allocation11], %s291
        %p293 = pneg %p121
        %p294 = pneg %p118
        %p295 = pneg %p149
        %p296 = pneg %p146
        %s297 = sand.u32 %s136, 1
        %s298 = scalar_lea.sflag [#allocation8], %s297
        %s299 = sand.u32 %s136, 1
        %s300 = smul.addr %s299, 32
        %s301 = scalar_lea.vmem [#allocation12], %s300
        %s302 = smul.u32 4, %s28
        %s303 = smul.u32 4, %s28
        %s304 = smul.u32 4, %s28
        %s305 = smul.u32 4, %s28
        %p306 = scmp.eq.s32.totalorder %s30, 0
        // Predicated region
        $region45: #{tpu_custom_call.1} parent=31 // pred_check
          %p307 = pneg %p306
        $region46: #{tpu_custom_call.1} parent=31 // pred_check_branch
          %309 = sbr.rel (%p307) target = $region48
        $region47: #{tpu_custom_call.1} parent=31 // pred_region
          %v310 = vld [vmem:[%s248] sm:$0xff]
          %v311 = vld [vmem:[%s248 + $0x8] sm:$0xff]
          %v312 = vld [vmem:[%s248 + $0x10] sm:$0xff]
          %v313 = vld [vmem:[%s248 + $0x18] sm:$0xff]
          %v314 = vmul.f32 %v310, 5.656854
          %v315 = vmul.f32 %v311, 5.656854
          %v316 = vmul.f32 %v312, 5.656854
          %v317 = vmul.f32 %v313, 5.656854
          %vm318 = vcmask 261120
          %319 = vst.msk [vmem:[#allocation2] sm:$0xff] %vm318, %v314
          %320 = vst.msk [vmem:[#allocation2 + $0x8] sm:$0xff] %vm318, %v315
          %321 = vst.msk [vmem:[#allocation2 + $0x10] sm:$0xff] %vm318, %v316
          %322 = vst.msk [vmem:[#allocation2 + $0x18] sm:$0xff] %vm318, %v317
          %vm323 = vcmask 7168
          %324 = vst.msk [vmem:[#allocation3] sm:$0xff] %vm323, -inf
          %325 = vst.msk [vmem:[#allocation3 + $0x8] sm:$0xff] %vm323, -inf
          %326 = vst.msk [vmem:[#allocation3 + $0x10] sm:$0xff] %vm323, -inf
          %327 = vst.msk [vmem:[#allocation3 + $0x18] sm:$0xff] %vm323, -inf
          %328 = vst.msk [vmem:[#allocation4] sm:$0xff] %vm323, 0.0
          %329 = vst.msk [vmem:[#allocation4 + $0x8] sm:$0xff] %vm323, 0.0
          %330 = vst.msk [vmem:[#allocation4 + $0x10] sm:$0xff] %vm323, 0.0
          %331 = vst.msk [vmem:[#allocation4 + $0x18] sm:$0xff] %vm323, 0.0
          %332 = vst.msk [vmem:[#allocation5] sm:$0xff] %vm318, 0.0
          %333 = vst.msk [vmem:[#allocation5 + $0x8] sm:$0xff] %vm318, 0.0
          %334 = vst.msk [vmem:[#allocation5 + $0x10] sm:$0xff] %vm318, 0.0
          %335 = vst.msk [vmem:[#allocation5 + $0x18] sm:$0xff] %vm318, 0.0
        $region48: #{tpu_custom_call.1} parent=31 // pred_fallthru
          _
        %v336 = vld [vmem:[#allocation2] sm:$0xff]
        %v337 = vld [vmem:[#allocation2 + $0x8] sm:$0xff]
        %v338 = vld [vmem:[#allocation2 + $0x10] sm:$0xff]
        %v339 = vld [vmem:[#allocation2 + $0x18] sm:$0xff]
        %v340 = vld [vmem:[%s258] sm:$0xff]
        %v341 = vld [vmem:[%s258 + $0x8] sm:$0xff]
        %v342 = vld [vmem:[%s258 + $0x10] sm:$0xff]
        %v343 = vld [vmem:[%s258 + $0x18] sm:$0xff]
        %v344 = vld [vmem:[%s268] sm:$0xff]
        %v345 = vld [vmem:[%s268 + $0x8] sm:$0xff]
        %v346 = vld [vmem:[%s268 + $0x10] sm:$0xff]
        %v347 = vld [vmem:[%s268 + $0x18] sm:$0xff]
        %vm348 = vcmask 261120
        %v350 = vsel %vm348, %v336, 0
        %v353 = vsel %vm348, %v340, 0
        %355 = vmatpush.xpose.msra.mxu0 0.0
        %356 = vmatpush.xpose.msra.mxu0 0.0
        %357 = vmatpush.xpose.msra.mxu0 0.0
        %358 = vmatpush.xpose.msra.mxu0 0.0
        %359 = vmatpush.xpose.msra.mxu0 0.0
        %360 = vmatpush.xpose.msra.mxu0 0.0
        %361 = vmatpush.xpose.msra.mxu0 0.0
        %362 = vmatpush.xpose.msra.mxu0 0.0
        %363 = vmatpush.xpose.msra.mxu0 0.0
        %364 = vmatpush.xpose.msra.mxu0 0.0
        %365 = vmatpush.xpose.msra.mxu0 0.0
        %366 = vmatpush.xpose.msra.mxu0 0.0
        %367 = vmatpush.xpose.msra.mxu0 0.0
        %368 = vmatpush.xpose.msra.mxu0 0.0
        %369 = vmatpush.xpose.msra.mxu0 0.0
        %370 = vmatpush.xpose.msra.mxu0 %v353
        %371 = vmatmul.f32.gmra.mxu0 %v350
        %v372 = vpop.f32.mrf.mxu0
        %v373 = vadd.f32 0.0, %v372
        %374 = vdwg.mxu0
        %v376 = vsel %vm348, %v337, 0
        %v379 = vsel %vm348, %v341, 0
        %381 = vmatpush.xpose.msra.mxu0 0.0
        %382 = vmatpush.xpose.msra.mxu0 0.0
        %383 = vmatpush.xpose.msra.mxu0 0.0
        %384 = vmatpush.xpose.msra.mxu0 0.0
        %385 = vmatpush.xpose.msra.mxu0 0.0
        %386 = vmatpush.xpose.msra.mxu0 0.0
        %387 = vmatpush.xpose.msra.mxu0 0.0
        %388 = vmatpush.xpose.msra.mxu0 0.0
        %389 = vmatpush.xpose.msra.mxu0 0.0
        %390 = vmatpush.xpose.msra.mxu0 0.0
        %391 = vmatpush.xpose.msra.mxu0 0.0
        %392 = vmatpush.xpose.msra.mxu0 0.0
        %393 = vmatpush.xpose.msra.mxu0 0.0
        %394 = vmatpush.xpose.msra.mxu0 0.0
        %395 = vmatpush.xpose.msra.mxu0 0.0
        %396 = vmatpush.xpose.msra.mxu0 %v379
        %397 = vmatmul.f32.gmra.mxu0 %v376
        %v398 = vpop.f32.mrf.mxu0
        %v399 = vadd.f32 0.0, %v398
        %400 = vdwg.mxu0
        %v402 = vsel %vm348, %v338, 0
        %v405 = vsel %vm348, %v342, 0
        %407 = vmatpush.xpose.msra.mxu0 0.0
        %408 = vmatpush.xpose.msra.mxu0 0.0
        %409 = vmatpush.xpose.msra.mxu0 0.0
        %410 = vmatpush.xpose.msra.mxu0 0.0
        %411 = vmatpush.xpose.msra.mxu0 0.0
        %412 = vmatpush.xpose.msra.mxu0 0.0
        %413 = vmatpush.xpose.msra.mxu0 0.0
        %414 = vmatpush.xpose.msra.mxu0 0.0
        %415 = vmatpush.xpose.msra.mxu0 0.0
        %416 = vmatpush.xpose.msra.mxu0 0.0
        %417 = vmatpush.xpose.msra.mxu0 0.0
        %418 = vmatpush.xpose.msra.mxu0 0.0
        %419 = vmatpush.xpose.msra.mxu0 0.0
        %420 = vmatpush.xpose.msra.mxu0 0.0
        %421 = vmatpush.xpose.msra.mxu0 0.0
        %422 = vmatpush.xpose.msra.mxu0 %v405
        %423 = vmatmul.f32.gmra.mxu0 %v402
        %v424 = vpop.f32.mrf.mxu0
        %v425 = vadd.f32 0.0, %v424
        %426 = vdwg.mxu0
        %v428 = vsel %vm348, %v339, 0
        %v431 = vsel %vm348, %v343, 0
        %433 = vmatpush.xpose.msra.mxu0 0.0
        %434 = vmatpush.xpose.msra.mxu0 0.0
        %435 = vmatpush.xpose.msra.mxu0 0.0
        %436 = vmatpush.xpose.msra.mxu0 0.0
        %437 = vmatpush.xpose.msra.mxu0 0.0
        %438 = vmatpush.xpose.msra.mxu0 0.0
        %439 = vmatpush.xpose.msra.mxu0 0.0
        %440 = vmatpush.xpose.msra.mxu0 0.0
        %441 = vmatpush.xpose.msra.mxu0 0.0
        %442 = vmatpush.xpose.msra.mxu0 0.0
        %443 = vmatpush.xpose.msra.mxu0 0.0
        %444 = vmatpush.xpose.msra.mxu0 0.0
        %445 = vmatpush.xpose.msra.mxu0 0.0
        %446 = vmatpush.xpose.msra.mxu0 0.0
        %447 = vmatpush.xpose.msra.mxu0 0.0
        %448 = vmatpush.xpose.msra.mxu0 %v431
        %449 = vmatmul.f32.gmra.mxu0 %v428
        %v450 = vpop.f32.mrf.mxu0
        %v451 = vadd.f32 0.0, %v450
        %452 = vdwg.mxu0
        %v453 = vld [vmem:[#allocation3] sm:$0xff]
        %v454 = vld [vmem:[#allocation3 + $0x8] sm:$0xff]
        %v455 = vld [vmem:[#allocation3 + $0x10] sm:$0xff]
        %v456 = vld [vmem:[#allocation3 + $0x18] sm:$0xff]
        %vm457 = vcmask 64512
        %v458 = vsel %vm457, %v373, -inf
        %459 = vmax.xlane.f32.xlu0 %v458
        %v460 = vpop.xlane.xlu0 %459
        %v461 = vsel %vm457, %v399, -inf
        %462 = vmax.xlane.f32.xlu0 %v461
        %v463 = vpop.xlane.xlu0 %462
        %v464 = vsel %vm457, %v425, -inf
        %465 = vmax.xlane.f32.xlu0 %v464
        %v466 = vpop.xlane.xlu0 %465
        %v467 = vsel %vm457, %v451, -inf
        %468 = vmax.xlane.f32.xlu0 %v467
        %v469 = vpop.xlane.xlu0 %468
        %v470 = vmax.f32 %v453, %v460
        %v471 = vmax.f32 %v454, %v463
        %v472 = vmax.f32 %v455, %v466
        %v473 = vmax.f32 %v456, %v469
        %v474 = vsub.f32 %v453, %v470
        %v475 = vsub.f32 %v454, %v471
        %v476 = vsub.f32 %v455, %v472
        %v477 = vsub.f32 %v456, %v473
        %v478 = vmul.f32 %v474, 1.442695
        %v479 = vpow.pop %v478
        %v480 = vmul.f32 %v475, 1.442695
        %v481 = vpow.pop %v480
        %v482 = vmul.f32 %v476, 1.442695
        %v483 = vpow.pop %v482
        %v484 = vmul.f32 %v477, 1.442695
        %v485 = vpow.pop %v484
        %487 = vset.pattern.permute.xlu0 0
        %488 = vperm.xlu0 %487, %v470
        %v489 = vpop.permute.xlu0 %488
        %492 = vset.pattern.permute.xlu0 0
        %493 = vperm.xlu0 %492, %v471
        %v494 = vpop.permute.xlu0 %493
        %497 = vset.pattern.permute.xlu0 0
        %498 = vperm.xlu0 %497, %v472
        %v499 = vpop.permute.xlu0 %498
        %502 = vset.pattern.permute.xlu0 0
        %503 = vperm.xlu0 %502, %v473
        %v504 = vpop.permute.xlu0 %503
        %v506 = vsub.f32 %v373, %v489
        %v507 = vsub.f32 %v399, %v494
        %v508 = vsub.f32 %v425, %v499
        %v509 = vsub.f32 %v451, %v504
        %v510 = vmul.f32 %v506, 1.442695
        %v511 = vpow.pop %v510
        %v512 = vmul.f32 %v507, 1.442695
        %v513 = vpow.pop %v512
        %v514 = vmul.f32 %v508, 1.442695
        %v515 = vpow.pop %v514
        %v516 = vmul.f32 %v509, 1.442695
        %v517 = vpow.pop %v516
        %v518 = vld [vmem:[#allocation4] sm:$0xff]
        %v519 = vld [vmem:[#allocation4 + $0x8] sm:$0xff]
        %v520 = vld [vmem:[#allocation4 + $0x10] sm:$0xff]
        %v521 = vld [vmem:[#allocation4 + $0x18] sm:$0xff]
        %v522 = vmul.f32 %v479, %v518
        %v523 = vmul.f32 %v481, %v519
        %v524 = vmul.f32 %v483, %v520
        %v525 = vmul.f32 %v485, %v521
        %v526 = vsel %vm457, %v511, 0.0
        %527 = vadd.xlane.f32.xlu0 %v526
        %v528 = vpop.xlane.xlu0 %527
        %v529 = vsel %vm457, %v513, 0.0
        %530 = vadd.xlane.f32.xlu0 %v529
        %v531 = vpop.xlane.xlu0 %530
        %v532 = vsel %vm457, %v515, 0.0
        %533 = vadd.xlane.f32.xlu0 %v532
        %v534 = vpop.xlane.xlu0 %533
        %v535 = vsel %vm457, %v517, 0.0
        %536 = vadd.xlane.f32.xlu0 %v535
        %v537 = vpop.xlane.xlu0 %536
        %v538 = vadd.f32 %v522, %v528
        %v539 = vadd.f32 %v523, %v531
        %v540 = vadd.f32 %v524, %v534
        %v541 = vadd.f32 %v525, %v537
        %vm542 = vcmask 7168
        %543 = vst.msk [vmem:[#allocation4] sm:$0xff] %vm542, %v538
        %544 = vst.msk [vmem:[#allocation4 + $0x8] sm:$0xff] %vm542, %v539
        %545 = vst.msk [vmem:[#allocation4 + $0x10] sm:$0xff] %vm542, %v540
        %546 = vst.msk [vmem:[#allocation4 + $0x18] sm:$0xff] %vm542, %v541
        %v548 = vsel %vm457, %v511, 0
        %550 = vmatpush.msra.mxu0 0.0
        %551 = vmatpush.msra.mxu0 0.0
        %552 = vmatpush.msra.mxu0 0.0
        %553 = vmatpush.msra.mxu0 0.0
        %554 = vmatpush.msra.mxu0 0.0
        %555 = vmatpush.msra.mxu0 0.0
        %556 = vmatpush.msra.mxu0 0.0
        %557 = vmatpush.msra.mxu0 0.0
        %558 = vmatpush.msra.mxu0 0.0
        %559 = vmatpush.msra.mxu0 0.0
        %560 = vmatpush.msra.mxu0 0.0
        %561 = vmatpush.msra.mxu0 0.0
        %562 = vmatpush.msra.mxu0 0.0
        %563 = vmatpush.msra.mxu0 0.0
        %564 = vmatpush.msra.mxu0 0.0
        %565 = vmatpush.msra.mxu0 %v344
        %566 = vmatmul.f32.gmra.mxu0 %v548
        %v567 = vpop.f32.mrf.mxu0
        %v568 = vadd.f32 0.0, %v567
        %569 = vdwg.mxu0
        %v571 = vsel %vm457, %v513, 0
        %573 = vmatpush.msra.mxu0 0.0
        %574 = vmatpush.msra.mxu0 0.0
        %575 = vmatpush.msra.mxu0 0.0
        %576 = vmatpush.msra.mxu0 0.0
        %577 = vmatpush.msra.mxu0 0.0
        %578 = vmatpush.msra.mxu0 0.0
        %579 = vmatpush.msra.mxu0 0.0
        %580 = vmatpush.msra.mxu0 0.0
        %581 = vmatpush.msra.mxu0 0.0
        %582 = vmatpush.msra.mxu0 0.0
        %583 = vmatpush.msra.mxu0 0.0
        %584 = vmatpush.msra.mxu0 0.0
        %585 = vmatpush.msra.mxu0 0.0
        %586 = vmatpush.msra.mxu0 0.0
        %587 = vmatpush.msra.mxu0 0.0
        %588 = vmatpush.msra.mxu0 %v345
        %589 = vmatmul.f32.gmra.mxu0 %v571
        %v590 = vpop.f32.mrf.mxu0
        %v591 = vadd.f32 0.0, %v590
        %592 = vdwg.mxu0
        %v594 = vsel %vm457, %v515, 0
        %596 = vmatpush.msra.mxu0 0.0
        %597 = vmatpush.msra.mxu0 0.0
        %598 = vmatpush.msra.mxu0 0.0
        %599 = vmatpush.msra.mxu0 0.0
        %600 = vmatpush.msra.mxu0 0.0
        %601 = vmatpush.msra.mxu0 0.0
        %602 = vmatpush.msra.mxu0 0.0
        %603 = vmatpush.msra.mxu0 0.0
        %604 = vmatpush.msra.mxu0 0.0
        %605 = vmatpush.msra.mxu0 0.0
        %606 = vmatpush.msra.mxu0 0.0
        %607 = vmatpush.msra.mxu0 0.0
        %608 = vmatpush.msra.mxu0 0.0
        %609 = vmatpush.msra.mxu0 0.0
        %610 = vmatpush.msra.mxu0 0.0
        %611 = vmatpush.msra.mxu0 %v346
        %612 = vmatmul.f32.gmra.mxu0 %v594
        %v613 = vpop.f32.mrf.mxu0
        %v614 = vadd.f32 0.0, %v613
        %615 = vdwg.mxu0
        %v617 = vsel %vm457, %v517, 0
        %619 = vmatpush.msra.mxu0 0.0
        %620 = vmatpush.msra.mxu0 0.0
        %621 = vmatpush.msra.mxu0 0.0
        %622 = vmatpush.msra.mxu0 0.0
        %623 = vmatpush.msra.mxu0 0.0
        %624 = vmatpush.msra.mxu0 0.0
        %625 = vmatpush.msra.mxu0 0.0
        %626 = vmatpush.msra.mxu0 0.0
        %627 = vmatpush.msra.mxu0 0.0
        %628 = vmatpush.msra.mxu0 0.0
        %629 = vmatpush.msra.mxu0 0.0
        %630 = vmatpush.msra.mxu0 0.0
        %631 = vmatpush.msra.mxu0 0.0
        %632 = vmatpush.msra.mxu0 0.0
        %633 = vmatpush.msra.mxu0 0.0
        %634 = vmatpush.msra.mxu0 %v347
        %635 = vmatmul.f32.gmra.mxu0 %v617
        %v636 = vpop.f32.mrf.mxu0
        %v637 = vadd.f32 0.0, %v636
        %638 = vdwg.mxu0
        %v639 = vld [vmem:[#allocation5] sm:$0xff]
        %v640 = vld [vmem:[#allocation5 + $0x8] sm:$0xff]
        %v641 = vld [vmem:[#allocation5 + $0x10] sm:$0xff]
        %v642 = vld [vmem:[#allocation5 + $0x18] sm:$0xff]
        %644 = vset.pattern.permute.xlu0 0
        %645 = vperm.xlu0 %644, %v479
        %v646 = vpop.permute.xlu0 %645
        %649 = vset.pattern.permute.xlu0 0
        %650 = vperm.xlu0 %649, %v481
        %v651 = vpop.permute.xlu0 %650
        %654 = vset.pattern.permute.xlu0 0
        %655 = vperm.xlu0 %654, %v483
        %v656 = vpop.permute.xlu0 %655
        %659 = vset.pattern.permute.xlu0 0
        %660 = vperm.xlu0 %659, %v485
        %v661 = vpop.permute.xlu0 %660
        %v663 = vmul.f32 %v646, %v639
        %v664 = vmul.f32 %v651, %v640
        %v665 = vmul.f32 %v656, %v641
        %v666 = vmul.f32 %v661, %v642
        %v667 = vadd.f32 %v663, %v568
        %v668 = vadd.f32 %v664, %v591
        %v669 = vadd.f32 %v665, %v614
        %v670 = vadd.f32 %v666, %v637
        %671 = vst.msk [vmem:[#allocation5] sm:$0xff] %vm348, %v667
        %672 = vst.msk [vmem:[#allocation5 + $0x8] sm:$0xff] %vm348, %v668
        %673 = vst.msk [vmem:[#allocation5 + $0x10] sm:$0xff] %vm348, %v669
        %674 = vst.msk [vmem:[#allocation5 + $0x18] sm:$0xff] %vm348, %v670
        %675 = vst.msk [vmem:[#allocation3] sm:$0xff] %vm542, %v470
        %676 = vst.msk [vmem:[#allocation3 + $0x8] sm:$0xff] %vm542, %v471
        %677 = vst.msk [vmem:[#allocation3 + $0x10] sm:$0xff] %vm542, %v472
        %678 = vst.msk [vmem:[#allocation3 + $0x18] sm:$0xff] %vm542, %v473
        // Predicated region
        $region49: #{tpu_custom_call.1} parent=31 // pred_check
          %p679 = pneg %p306
        $region50: #{tpu_custom_call.1} parent=31 // pred_check_branch
          %681 = sbr.rel (%p679) target = $region52
        $region51: #{tpu_custom_call.1} parent=31 // pred_region
          %v682 = vld [vmem:[#allocation5] sm:$0xff]
          %v683 = vld [vmem:[#allocation5 + $0x8] sm:$0xff]
          %v684 = vld [vmem:[#allocation5 + $0x10] sm:$0xff]
          %v685 = vld [vmem:[#allocation5 + $0x18] sm:$0xff]
          %v686 = vld [vmem:[#allocation4] sm:$0xff]
          %v687 = vld [vmem:[#allocation4 + $0x8] sm:$0xff]
          %v688 = vld [vmem:[#allocation4 + $0x10] sm:$0xff]
          %v689 = vld [vmem:[#allocation4 + $0x18] sm:$0xff]
          %691 = vset.pattern.permute.xlu0 0
          %692 = vperm.xlu0 %691, %v686
          %v693 = vpop.permute.xlu0 %692
          %696 = vset.pattern.permute.xlu0 0
          %697 = vperm.xlu0 %696, %v687
          %v698 = vpop.permute.xlu0 %697
          %701 = vset.pattern.permute.xlu0 0
          %702 = vperm.xlu0 %701, %v688
          %v703 = vpop.permute.xlu0 %702
          %706 = vset.pattern.permute.xlu0 0
          %707 = vperm.xlu0 %706, %v689
          %v708 = vpop.permute.xlu0 %707
          %v710 = vrcp.pop %v693
          %v711 = vmul.f32 %v693, %v710
          %v712 = vsub.f32 1.0, %v711
          %v713 = vmul.f32 %v710, %v712
          %v714 = vadd.f32 %v710, %v713
          %vm715 = vweird.f32 %v693
          %vm716 = vweird.f32 %v710
          %vm717 = vmor %vm715, %vm716
          %v718 = vsel %vm717, %v710, %v714
          %v719 = vand.u32 2147483647, %v693
          %vm720 = vcmp.eq.f32.partialorder %v719, 8.507059e+37
          %v721 = vand.u32 %v693, 2147483648
          %v722 = vor.u32 1.1754944e-38, %v721
          %v723 = vsel %vm720, %v722, %v718
          %v724 = vmul.f32 %v682, %v723
          %v725 = vrcp.pop %v698
          %v726 = vmul.f32 %v698, %v725
          %v727 = vsub.f32 1.0, %v726
          %v728 = vmul.f32 %v725, %v727
          %v729 = vadd.f32 %v725, %v728
          %vm730 = vweird.f32 %v698
          %vm731 = vweird.f32 %v725
          %vm732 = vmor %vm730, %vm731
          %v733 = vsel %vm732, %v725, %v729
          %v734 = vand.u32 2147483647, %v698
          %vm735 = vcmp.eq.f32.partialorder %v734, 8.507059e+37
          %v736 = vand.u32 %v698, 2147483648
          %v737 = vor.u32 1.1754944e-38, %v736
          %v738 = vsel %vm735, %v737, %v733
          %v739 = vmul.f32 %v683, %v738
          %v740 = vrcp.pop %v703
          %v741 = vmul.f32 %v703, %v740
          %v742 = vsub.f32 1.0, %v741
          %v743 = vmul.f32 %v740, %v742
          %v744 = vadd.f32 %v740, %v743
          %vm745 = vweird.f32 %v703
          %vm746 = vweird.f32 %v740
          %vm747 = vmor %vm745, %vm746
          %v748 = vsel %vm747, %v740, %v744
          %v749 = vand.u32 2147483647, %v703
          %vm750 = vcmp.eq.f32.partialorder %v749, 8.507059e+37
          %v751 = vand.u32 %v703, 2147483648
          %v752 = vor.u32 1.1754944e-38, %v751
          %v753 = vsel %vm750, %v752, %v748
          %v754 = vmul.f32 %v684, %v753
          %v755 = vrcp.pop %v708
          %v756 = vmul.f32 %v708, %v755
          %v757 = vsub.f32 1.0, %v756
          %v758 = vmul.f32 %v755, %v757
          %v759 = vadd.f32 %v755, %v758
          %vm760 = vweird.f32 %v708
          %vm761 = vweird.f32 %v755
          %vm762 = vmor %vm760, %vm761
          %v763 = vsel %vm762, %v755, %v759
          %v764 = vand.u32 2147483647, %v708
          %vm765 = vcmp.eq.f32.partialorder %v764, 8.507059e+37
          %v766 = vand.u32 %v708, 2147483648
          %v767 = vor.u32 1.1754944e-38, %v766
          %v768 = vsel %vm765, %v767, %v763
          %v769 = vmul.f32 %v685, %v768
          %770 = vst.msk [vmem:[%s301] sm:$0xff] %vm348, %v724
          %771 = vst.msk [vmem:[%s301 + $0x8] sm:$0xff] %vm348, %v739
          %772 = vst.msk [vmem:[%s301 + $0x10] sm:$0xff] %vm348, %v754
          %773 = vst.msk [vmem:[%s301 + $0x18] sm:$0xff] %vm348, %v769
        $region52: #{tpu_custom_call.1} parent=31 // pred_fallthru
          _
        %s774 = sand.u32 %s136, 1
        %s775 = scalar_lea.sflag [#allocation8], %s774
        %s776 = sand.u32 %s136, 1
        %s777 = smul.addr %s776, 32
        %s778 = scalar_lea.vmem [#allocation12], %s777
        // Predicated region
        $region53: #{tpu_custom_call.1} parent=31 // pred_check
          %p779 = pneg %p146
        $region54: #{tpu_custom_call.1} parent=31 // pred_check_branch
          %781 = sbr.rel (%p779) target = $region56
        $region55: #{tpu_custom_call.1} parent=31 // pred_region
          %s782 = smul.u32 4, %s28
          %784 = vsyncadd %s775, 0
          %s785 = sadd.s32 %s29, %s782
          %s786 = smul.addr %s785, 8
          %s787 = scalar_lea.hbm %s3, %s786
          %s788 = sshll.u32 %s778, 4
          %s789 = int_to_ptr.vmem [resolvable:$true] %s788
          %s790 = sshll.u32 %s787, 4
          %s791 = int_to_ptr.hbm [resolvable:$true] %s790
          %796 = dma.vmem_to_hbm [thread:$0]  %s789, 512, %s791, %s775, 128, 128, 8
        $region56: #{tpu_custom_call.1} parent=31 // pred_fallthru
          _
      $region32: #{tpu_custom_call.1} parent=5 // pred_fallthru
        _
      %p797 = scmp.le.s32.totalorder 2, %s18
      // Predicated region
      $region57: #{tpu_custom_call.1} parent=5 // pred_check
        %p798 = pneg %p797
      $region58: #{tpu_custom_call.1} parent=5 // pred_check_branch
        %800 = sbr.rel (%p798) target = $region60
      $region59: #{tpu_custom_call.1} parent=5 // pred_region
        %s801 = ssub.s32 %s18, 2
        // Predicated region
        $region61: #{tpu_custom_call.1} parent=59 // pred_check
          %p802 = pneg %p152
        $region62: #{tpu_custom_call.1} parent=59 // pred_check_branch
          %804 = sbr.rel (%p802) target = $region64
        $region63: #{tpu_custom_call.1} parent=59 // pred_region
          %s805 = sand.u32 %s137, 1
          %s806 = scalar_lea.sflag [#allocation8], %s805
          %s807 = sand.u32 %s137, 1
          %s808 = smul.addr %s807, 32
          %s809 = scalar_lea.vmem [#allocation12], %s808
          %811 = dma.done %s806, 512
        $region64: #{tpu_custom_call.1} parent=59 // pred_fallthru
          _
      $region60: #{tpu_custom_call.1} parent=5 // pred_fallthru
        _
    $region6: #{tpu_custom_call.1} parent=1 // loop_footer
      %s22 = sadd.s32 1, %s18
    $region7: #{tpu_custom_call.1} parent=1 // loop_footer_branch
      %17 = sbr.rel target = $region3
    $region8: #{tpu_custom_call.1} parent=1 // loop_exit
      _
    %812 = vsyncpa [#allocation7], 1
    %s813 = scalar_lea.sflag [#allocation7], 1
    %814 = vsyncpa %s813, 1
    %815 = vsyncpa [#allocation10], 1
    %s816 = scalar_lea.sflag [#allocation10], 1
    %817 = vsyncpa %s816, 1
    %818 = vsyncpa [#allocation8], 1
    %s819 = scalar_lea.sflag [#allocation8], 1
    %820 = vsyncpa %s819, 1

</llo_original>
